<compile_context>
chip_gen: v7x
topology: tpu7x:2x2x1
jax: 0.10.0
libtpu: 0.0.40
codegen_flags: <defaults>
</compile_context>

<pallas_src>
import jax
import jax.numpy as jnp
from jax.experimental import pallas as pl
from jax.experimental.pallas import tpu as pltpu


# ----------------------- packed-parameter layout --------------------------- #
def _build_layout(c1=32, c2=64, c3=128, r1=2, r2=4, num_classes=2):
    """name -> (row0, nrows, lane0, ncols) inside one (rows, 128) fp32 slab."""
    assert 2 * c1 + r1 <= 128 and 2 * c2 <= 128 and c3 <= 128 and r2 <= c2
    offs = {}
    # group 0: conv1 + SE1 small tensors, co-packed into one 8-row block
    offs['conv1_w'] = (0, 3, 0, c1)
    offs['conv1_b'] = (3, 1, 0, c1)
    offs['se1_b2'] = (3, 1, c1, c1)
    offs['se1_b1'] = (3, 1, 2 * c1, r1)
    offs['se1_w1'] = (4, r1, 0, c1)
    offs['se1_w2'] = (4 + r1, r1, 0, c1)
    g0_rows = ((4 + 2 * r1 + 7) // 8) * 8
    # group 1: conv2 bias + SE2 small tensors
    g1 = g0_rows
    offs['conv2_b'] = (g1, 1, 0, c2)
    offs['se2_b2'] = (g1, 1, c2, c2)
    offs['se2_w1'] = (g1 + 1, r2, 0, c2)
    offs['se2_w2'] = (g1 + 1, r2, c2, c2)
    offs['se2_b1'] = (g1 + 1 + r2, 1, 0, r2)
    g1_rows = ((2 + r2 + 7) // 8) * 8
    # group 2: conv3 bias + fc
    g2 = g1 + g1_rows
    offs['conv3_b'] = (g2, 1, 0, c3)
    offs['fc_w'] = (g2 + 1, num_classes, 0, c3)
    offs['fc_b'] = (g2 + 1 + num_classes, 1, 0, num_classes)
    g2_rows = ((2 + num_classes + 7) // 8) * 8
    # big conv weights on their own sublane-aligned rows
    cw2 = g2 + g2_rows
    offs['conv2_w'] = (cw2, 3 * c1, 0, c2)
    cw3 = cw2 + ((3 * c1 + 7) // 8) * 8
    offs['conv3_w'] = (cw3, 3 * c2, 0, c3)
    rows = cw3 + ((3 * c2 + 7) // 8) * 8
    return offs, rows


# ----------------------------- Pallas kernel ------------------------------- #
def _make_kernel(offs, n, l):
    """Kernel specialized for (static) batch n and sequence length l."""

    def kernel(x_ref, p_ref, out_ref):
        nl = n * l  # == x_ref.shape[0]

        def getp(name):
            r0, r, c0, c = offs[name]
            return p_ref[r0:r0 + r, c0:c0 + c]

        # Per-sample boundary masks: rolls wrap across sample boundaries after
        # the batch fold, so the Conv1d zero-padding mask is row % l == 0 / l-1.
        row = jax.lax.broadcasted_iota(jnp.int32, (nl, 1), 0)
        pos = (row & (l - 1)) if (l & (l - 1)) == 0 else (row % l)
        at_start = pos == 0
        at_end = pos == (l - 1)

        def shift_prev(a):
            # out[r] = a[r-1] within each sample, 0 at sample start (zero pad)
            return jnp.where(at_start, 0.0, pltpu.roll(a, shift=1, axis=0))

        def shift_next(a):
            # out[r] = a[r+1] within each sample, 0 at sample end (zero pad)
            return jnp.where(at_end, 0.0, pltpu.roll(a, shift=nl - 1, axis=0))

        def conv3x(h, w, b):
            # h: (nl, cin); w: (3*cin, cout) tap-major [k=-1, 0, +1]; b: (1, cout).
            # Three accumulating MXU dots (K = cin is one K-pass everywhere),
            # avoiding the lane-concat relayout of a single im2col matmul.
            cin = h.shape[1]
            out = jnp.dot(shift_prev(h), w[0:cin, :],
                          preferred_element_type=jnp.float32)
            out = out + jnp.dot(h, w[cin:2 * cin, :],
                                preferred_element_type=jnp.float32)
            out = out + jnp.dot(shift_next(h), w[2 * cin:3 * cin, :],
                                preferred_element_type=jnp.float32)
            return out + b

        def se(h, w1, b1, w2t, b2):
            # h: (nl, C).  w1: (r, C) [fc1.weight], b1: (1, r) [fc1.bias],
            # w2t: (r, C) [fc2.weight^T], b2: (1, C) [fc2.bias].  Pure VPU/XLU;
            # r in {2, 4} so MXU pushes would waste nearly whole result pops.
            C = h.shape[1]
            r = w1.shape[0]
            h3 = h.reshape(n, l, C)           # free sublane view (l % 8 == 0)
            sq = jnp.mean(h3, axis=1)         # (n, C) per-sample squeeze
            s_pre = None
            for i in range(r):                # unrolled tiny bottleneck MLP
                e_i = jnp.maximum(
                    jnp.sum(sq * w1[i:i + 1, :], axis=1, keepdims=True)
                    + b1[:, i:i + 1], 0.0)    # (n, 1)
                term = e_i * w2t[i:i + 1, :]  # (n, C)
                s_pre = term if s_pre is None else s_pre + term
            s = jax.nn.sigmoid(s_pre + b2)    # (n, C)
            return (h3 * s[:, None, :]).reshape(nl, C)

        x = x_ref[...]                                        # (nl, 1)

        # --- conv1 (cin = 1): VPU outer-product taps, no MXU ---
        w1 = getp('conv1_w')                                  # (3, 32)
        xb = jnp.broadcast_to(x, (nl, w1.shape[1]))           # hoisted lane broadcast
        h = (shift_prev(xb) * w1[0:1, :] + xb * w1[1:2, :]
             + shift_next(xb) * w1[2:3, :] + getp('conv1_b')) # (nl, 32)
        h = jnp.maximum(
            se(h, getp('se1_w1'), getp('se1_b1'), getp('se1_w2'), getp('se1_b2')),
            0.0)

        # --- conv2 -> SE2 -> relu ---
        h = conv3x(h, getp('conv2_w'), getp('conv2_b'))       # (nl, 64)
        h = jnp.maximum(
            se(h, getp('se2_w1'), getp('se2_b1'), getp('se2_w2'), getp('se2_b2')),
            0.0)

        # --- conv3 -> relu ---
        h = jnp.maximum(conv3x(h, getp('conv3_w'), getp('conv3_b')), 0.0)  # (nl, 128)

        # --- global average pool + fc; lane-dense (n, num_classes) output ---
        g = jnp.mean(h.reshape(n, l, h.shape[1]), axis=1)                  # (n, 128)
        fc_w = getp('fc_w')                                                # (nc, 128)
        out_ref[...] = (jnp.sum(g[:, None, :] * fc_w[None, :, :], axis=2)
                        + getp('fc_b'))

    return kernel


# ------------------------------- wrapper ----------------------------------- #
def _pack_params(p, offs, rows):
    def im2col_w(w):  # (Cout, Cin, 3) -> (3*Cin, Cout), tap-major rows
        return jnp.transpose(w, (2, 1, 0)).reshape(3 * w.shape[1], w.shape[0])

    vals = {
        'conv1_w': jnp.transpose(p['conv1_w'][:, 0, :]),      # (3, 32)
        'conv1_b': p['conv1_b'][None, :],                      # (1, 32)
        'se1_w1': p['se1_fc1_w'],                              # (2, 32)
        'se1_b1': p['se1_fc1_b'][None, :],                     # (1, 2)
        'se1_w2': jnp.transpose(p['se1_fc2_w']),               # (2, 32)
        'se1_b2': p['se1_fc2_b'][None, :],                     # (1, 32)
        'conv2_w': im2col_w(p['conv2_w']),                     # (96, 64)
        'conv2_b': p['conv2_b'][None, :],                      # (1, 64)
        'se2_w1': p['se2_fc1_w'],                              # (4, 64)
        'se2_b1': p['se2_fc1_b'][None, :],                     # (1, 4)
        'se2_w2': jnp.transpose(p['se2_fc2_w']),               # (4, 64)
        'se2_b2': p['se2_fc2_b'][None, :],                     # (1, 64)
        'conv3_w': im2col_w(p['conv3_w']),                     # (192, 128)
        'conv3_b': p['conv3_b'][None, :],                      # (1, 128)
        'fc_w': p['fc_w'],                                     # (NC, 128)
        'fc_b': p['fc_b'][None, :],                            # (1, NC)
    }
    buf = jnp.zeros((rows, 128), jnp.float32)
    for name, (r0, r, c0, c) in offs.items():
        v = vals[name].astype(jnp.float32)
        assert v.shape == (r, c), (name, v.shape, (r, c))
        buf = buf.at[r0:r0 + r, c0:c0 + c].set(v)
    return buf


def cnn1d3l_se_forward(x, p):
    """x: (N, Cin=1, L) float32, NCL layout (same as the PyTorch module)."""
    N, Cin, L = x.shape
    assert Cin == 1, "kernel is specialized to the module default input_channels=1"
    num_classes = p['fc_w'].shape[0]

    offs, rows = _build_layout(
        c1=p['conv1_w'].shape[0], c2=p['conv2_w'].shape[0], c3=p['conv3_w'].shape[0],
        r1=p['se1_fc1_w'].shape[0], r2=p['se2_fc1_w'].shape[0],
        num_classes=num_classes)
    params = _pack_params(p, offs, rows)      # one packed (rows, 128) slab -> one DMA

    # Whole batch folded into a single grid step: M = N*L rows per MXU push.
    # TODO(synk): for production batch sizes, tile batch over a grid so that
    #             B_tile*L ~= 128 (v5e) / 256 (v6e, v7x) rows per step.
    x_flat = x.reshape(N * L, 1)              # NCL -> (N*L, 1); free since Cin == 1

    out = pl.pallas_call(
        _make_kernel(offs, N, L),
        out_shape=jax.ShapeDtypeStruct((N, num_classes), jnp.float32),
        grid=(1,),
        in_specs=[
            pl.BlockSpec((N * L, 1), lambda i: (0, 0)),
            pl.BlockSpec((rows, 128), lambda i: (0, 0)),
        ],
        out_specs=pl.BlockSpec((N, num_classes), lambda i: (0, 0)),
    )(x_flat, params)
    return out


# -------------------------- pure-JAX reference ----------------------------- #
def reference_forward(x, p):
    def conv1d(h, w, b):  # h (N, C, L), w (Cout, Cin, 3), padding=1
        Lh = h.shape[2]
        hp = jnp.pad(h, ((0, 0), (0, 0), (1, 1)))
        out = jnp.zeros((h.shape[0], w.shape[0], Lh), jnp.float32)
        for k in range(3):
            out = out + jnp.einsum('ncl,oc->nol', hp[:, :, k:k + Lh], w[:, :, k])
        return out + b[None, :, None]

    def se(h, w1, b1, w2, b2):
        s = jnp.mean(h, axis=2)
        e = jax.nn.relu(s @ w1.T + b1)
        e = jax.nn.sigmoid(e @ w2.T + b2)
        return h * e[:, :, None]

    h = jax.nn.relu(se(conv1d(x, p['conv1_w'], p['conv1_b']),
                       p['se1_fc1_w'], p['se1_fc1_b'], p['se1_fc2_w'], p['se1_fc2_b']))
    h = jax.nn.relu(se(conv1d(h, p['conv2_w'], p['conv2_b']),
                       p['se2_fc1_w'], p['se2_fc1_b'], p['se2_fc2_w'], p['se2_fc2_b']))
    h = jax.nn.relu(conv1d(h, p['conv3_w'], p['conv3_b']))
    g = jnp.mean(h, axis=2)
    return g @ p['fc_w'].T + p['fc_b']


# ------------------------------- params ------------------------------------ #
def init_params(key):
    shapes = {
        'conv1_w': (32, 1, 3),   'conv1_b': (32,),
        'se1_fc1_w': (2, 32),    'se1_fc1_b': (2,),
        'se1_fc2_w': (32, 2),    'se1_fc2_b': (32,),
        'conv2_w': (64, 32, 3),  'conv2_b': (64,),
        'se2_fc1_w': (4, 64),    'se2_fc1_b': (4,),
        'se2_fc2_w': (64, 4),    'se2_fc2_b': (64,),
        'conv3_w': (128, 64, 3), 'conv3_b': (128,),
        'fc_w': (2, 128),        'fc_b': (2,),
    }
    keys = jax.random.split(key, len(shapes))
    return {name: 0.1 * jax.random.normal(k, shp, jnp.float32)
            for (name, shp), k in zip(shapes.items(), keys)}


if __name__ == "__main__":
    key = jax.random.PRNGKey(0)
    kx, kp = jax.random.split(key)
    # batch=2, input_channels=1, sequence length=16 (nn.Conv1d NCL input)
    x = jax.random.normal(kx, (2, 1, 16), jnp.float32)
    params = init_params(kp)

    out = jax.block_until_ready(cnn1d3l_se_forward(x, params))
    ref = reference_forward(x, params)
    assert out.shape == (2, 2)
    assert jnp.allclose(out, ref, rtol=1e-4, atol=1e-5), (out, ref)

    print("KERNEL_OK")
</pallas_src>

<mosaic_0001>
module attributes {stable_mosaic.version = 11 : i64} {
  func.func @kernel(%arg0: i32, %arg1: memref<32x1xf32, #tpu.memory_space<vmem>>, %arg2: memref<312x128xf32, #tpu.memory_space<vmem>>, %arg3: memref<2x2xf32, #tpu.memory_space<vmem>>) attributes {dimension_semantics = [#tpu.dimension_semantics<arbitrary>], iteration_bounds = array<i64: 1>, scalar_prefetch = 0 : i64, scratch_operands = 0 : i64, tpu.core_type = #tpu.core_type<tc>, window_params = [{pipeline_mode = #tpu.pipeline_mode<synchronous>, transform_indices = @transform_0, window_bounds = array<i64: 32, 1>}, {pipeline_mode = #tpu.pipeline_mode<synchronous>, transform_indices = @transform_1, window_bounds = array<i64: 312, 128>}, {pipeline_mode = #tpu.pipeline_mode<synchronous>, transform_indices = @transform_2, window_bounds = array<i64: 2, 2>}]} {
    %0 = tpu.iota {dimensions = array<i32: 0>} : vector<32x1xi32>
    %c15_i32 = arith.constant 15 : i32
    %1 = vector.broadcast %c15_i32 : i32 to vector<32x1xi32>
    %2 = arith.andi %0, %1 : vector<32x1xi32>
    %c0_i32 = arith.constant 0 : i32
    %3 = vector.broadcast %c0_i32 : i32 to vector<32x1xi32>
    %4 = arith.cmpi eq, %2, %3 : vector<32x1xi32>
    %c15_i32_0 = arith.constant 15 : i32
    %5 = vector.broadcast %c15_i32_0 : i32 to vector<32x1xi32>
    %6 = arith.cmpi eq, %2, %5 : vector<32x1xi32>
    %c0 = arith.constant 0 : index
    %c0_1 = arith.constant 0 : index
    %7 = vector.load %arg1[%c0, %c0_1] : memref<32x1xf32, #tpu.memory_space<vmem>>, vector<32x1xf32>
    %c0_2 = arith.constant 0 : index
    %c0_3 = arith.constant 0 : index
    %8 = vector.load %arg2[%c0_2, %c0_3] : memref<312x128xf32, #tpu.memory_space<vmem>>, vector<3x32xf32>
    %9 = vector.shape_cast %7 : vector<32x1xf32> to vector<32x1xf32>
    %10 = vector.broadcast %9 : vector<32x1xf32> to vector<32x32xf32>
    %c1_i32 = arith.constant 1 : i32
    %11 = tpu.dynamic_rotate %10 by %c1_i32 dim 0 : vector<32x32xf32>, i32 -> vector<32x32xf32>
    %cst = arith.constant 0.000000e+00 : f32
    %12 = vector.shape_cast %4 : vector<32x1xi1> to vector<32x1xi1>
    %13 = vector.broadcast %12 : vector<32x1xi1> to vector<32x32xi1>
    %14 = vector.broadcast %cst : f32 to vector<32x32xf32>
    %15 = arith.select %13, %14, %11 : vector<32x32xi1>, vector<32x32xf32>
    %16 = vector.extract_strided_slice %8 {offsets = [0, 0], sizes = [1, 32], strides = [1, 1]} : vector<3x32xf32> to vector<1x32xf32>
    %17 = vector.broadcast %16 : vector<1x32xf32> to vector<32x32xf32>
    %18 = arith.mulf %15, %17 : vector<32x32xf32>
    %19 = vector.extract_strided_slice %8 {offsets = [1, 0], sizes = [1, 32], strides = [1, 1]} : vector<3x32xf32> to vector<1x32xf32>
    %20 = vector.broadcast %19 : vector<1x32xf32> to vector<32x32xf32>
    %21 = arith.mulf %10, %20 : vector<32x32xf32>
    %22 = arith.addf %18, %21 : vector<32x32xf32>
    %c31_i32 = arith.constant 31 : i32
    %23 = tpu.dynamic_rotate %10 by %c31_i32 dim 0 : vector<32x32xf32>, i32 -> vector<32x32xf32>
    %cst_4 = arith.constant 0.000000e+00 : f32
    %24 = vector.shape_cast %6 : vector<32x1xi1> to vector<32x1xi1>
    %25 = vector.broadcast %24 : vector<32x1xi1> to vector<32x32xi1>
    %26 = vector.broadcast %cst_4 : f32 to vector<32x32xf32>
    %27 = arith.select %25, %26, %23 : vector<32x32xi1>, vector<32x32xf32>
    %28 = vector.extract_strided_slice %8 {offsets = [2, 0], sizes = [1, 32], strides = [1, 1]} : vector<3x32xf32> to vector<1x32xf32>
    %29 = vector.broadcast %28 : vector<1x32xf32> to vector<32x32xf32>
    %30 = arith.mulf %27, %29 : vector<32x32xf32>
    %31 = arith.addf %22, %30 : vector<32x32xf32>
    %c3 = arith.constant 3 : index
    %c0_5 = arith.constant 0 : index
    %32 = vector.load %arg2[%c3, %c0_5] : memref<312x128xf32, #tpu.memory_space<vmem>>, vector<1x32xf32>
    %33 = vector.broadcast %32 : vector<1x32xf32> to vector<32x32xf32>
    %34 = arith.addf %31, %33 : vector<32x32xf32>
    %c4 = arith.constant 4 : index
    %c0_6 = arith.constant 0 : index
    %35 = vector.load %arg2[%c4, %c0_6] : memref<312x128xf32, #tpu.memory_space<vmem>>, vector<2x32xf32>
    %c3_7 = arith.constant 3 : index
    %c64 = arith.constant 64 : index
    %36 = vector.load %arg2[%c3_7, %c64] : memref<312x128xf32, #tpu.memory_space<vmem>>, vector<1x2xf32>
    %c6 = arith.constant 6 : index
    %c0_8 = arith.constant 0 : index
    %37 = vector.load %arg2[%c6, %c0_8] : memref<312x128xf32, #tpu.memory_space<vmem>>, vector<2x32xf32>
    %c3_9 = arith.constant 3 : index
    %c32 = arith.constant 32 : index
    %38 = vector.load %arg2[%c3_9, %c32] : memref<312x128xf32, #tpu.memory_space<vmem>>, vector<1x32xf32>
    %39 = vector.shape_cast %34 : vector<32x32xf32> to vector<2x16x32xf32>
    %cst_10 = arith.constant dense<0.000000e+00> : vector<2x32xf32>
    %40 = vector.multi_reduction <add>, %39, %cst_10 [1] : vector<2x16x32xf32> to vector<2x32xf32>
    %cst_11 = arith.constant 1.600000e+01 : f32
    %41 = vector.broadcast %cst_11 : f32 to vector<2x32xf32>
    %42 = arith.divf %40, %41 : vector<2x32xf32>
    %43 = vector.extract_strided_slice %35 {offsets = [0, 0], sizes = [1, 32], strides = [1, 1]} : vector<2x32xf32> to vector<1x32xf32>
    %44 = vector.broadcast %43 : vector<1x32xf32> to vector<2x32xf32>
    %45 = arith.mulf %42, %44 : vector<2x32xf32>
    %cst_12 = arith.constant dense<0.000000e+00> : vector<2xf32>
    %46 = vector.multi_reduction <add>, %45, %cst_12 [1] : vector<2x32xf32> to vector<2xf32>
    %47 = vector.shape_cast %46 : vector<2xf32> to vector<2x1xf32>
    %48 = vector.extract_strided_slice %36 {offsets = [0, 0], sizes = [1, 1], strides = [1, 1]} : vector<1x2xf32> to vector<1x1xf32>
    %49 = vector.broadcast %48 : vector<1x1xf32> to vector<2x1xf32>
    %50 = arith.addf %47, %49 : vector<2x1xf32>
    %cst_13 = arith.constant 0.000000e+00 : f32
    %51 = vector.broadcast %cst_13 : f32 to vector<2x1xf32>
    %52 = arith.maximumf %50, %51 : vector<2x1xf32>
    %53 = vector.extract_strided_slice %37 {offsets = [0, 0], sizes = [1, 32], strides = [1, 1]} : vector<2x32xf32> to vector<1x32xf32>
    %54 = vector.broadcast %52 : vector<2x1xf32> to vector<2x32xf32>
    %55 = vector.broadcast %53 : vector<1x32xf32> to vector<2x32xf32>
    %56 = arith.mulf %54, %55 : vector<2x32xf32>
    %57 = vector.extract_strided_slice %35 {offsets = [1, 0], sizes = [1, 32], strides = [1, 1]} : vector<2x32xf32> to vector<1x32xf32>
    %58 = vector.broadcast %57 : vector<1x32xf32> to vector<2x32xf32>
    %59 = arith.mulf %42, %58 : vector<2x32xf32>
    %cst_14 = arith.constant dense<0.000000e+00> : vector<2xf32>
    %60 = vector.multi_reduction <add>, %59, %cst_14 [1] : vector<2x32xf32> to vector<2xf32>
    %61 = vector.shape_cast %60 : vector<2xf32> to vector<2x1xf32>
    %62 = vector.extract_strided_slice %36 {offsets = [0, 1], sizes = [1, 1], strides = [1, 1]} : vector<1x2xf32> to vector<1x1xf32>
    %63 = vector.broadcast %62 : vector<1x1xf32> to vector<2x1xf32>
    %64 = arith.addf %61, %63 : vector<2x1xf32>
    %cst_15 = arith.constant 0.000000e+00 : f32
    %65 = vector.broadcast %cst_15 : f32 to vector<2x1xf32>
    %66 = arith.maximumf %64, %65 : vector<2x1xf32>
    %67 = vector.extract_strided_slice %37 {offsets = [1, 0], sizes = [1, 32], strides = [1, 1]} : vector<2x32xf32> to vector<1x32xf32>
    %68 = vector.broadcast %66 : vector<2x1xf32> to vector<2x32xf32>
    %69 = vector.broadcast %67 : vector<1x32xf32> to vector<2x32xf32>
    %70 = arith.mulf %68, %69 : vector<2x32xf32>
    %71 = arith.addf %56, %70 : vector<2x32xf32>
    %72 = vector.broadcast %38 : vector<1x32xf32> to vector<2x32xf32>
    %73 = arith.addf %71, %72 : vector<2x32xf32>
    %74 = arith.negf %73 : vector<2x32xf32>
    %75 = math.exp %74 : vector<2x32xf32>
    %cst_16 = arith.constant 1.000000e+00 : f32
    %76 = vector.broadcast %cst_16 : f32 to vector<2x32xf32>
    %77 = arith.addf %76, %75 : vector<2x32xf32>
    %78 = arith.divf %76, %77 : vector<2x32xf32>
    %79 = vector.shape_cast %78 : vector<2x32xf32> to vector<2x1x32xf32>
    %80 = vector.broadcast %79 : vector<2x1x32xf32> to vector<2x16x32xf32>
    %81 = arith.mulf %39, %80 : vector<2x16x32xf32>
    %82 = vector.shape_cast %81 : vector<2x16x32xf32> to vector<32x32xf32>
    %cst_17 = arith.constant 0.000000e+00 : f32
    %83 = vector.broadcast %cst_17 : f32 to vector<32x32xf32>
    %84 = arith.maximumf %82, %83 : vector<32x32xf32>
    %c24 = arith.constant 24 : index
    %c0_18 = arith.constant 0 : index
    %85 = vector.load %arg2[%c24, %c0_18] : memref<312x128xf32, #tpu.memory_space<vmem>>, vector<96x64xf32>
    %c8 = arith.constant 8 : index
    %c0_19 = arith.constant 0 : index
    %86 = vector.load %arg2[%c8, %c0_19] : memref<312x128xf32, #tpu.memory_space<vmem>>, vector<1x64xf32>
    %c1_i32_20 = arith.constant 1 : i32
    %87 = tpu.dynamic_rotate %84 by %c1_i32_20 dim 0 : vector<32x32xf32>, i32 -> vector<32x32xf32>
    %cst_21 = arith.constant 0.000000e+00 : f32
    %88 = vector.shape_cast %4 : vector<32x1xi1> to vector<32x1xi1>
    %89 = vector.broadcast %88 : vector<32x1xi1> to vector<32x32xi1>
    %90 = vector.broadcast %cst_21 : f32 to vector<32x32xf32>
    %91 = arith.select %89, %90, %87 : vector<32x32xi1>, vector<32x32xf32>
    %92 = vector.extract_strided_slice %85 {offsets = [0, 0], sizes = [32, 64], strides = [1, 1]} : vector<96x64xf32> to vector<32x64xf32>
    %cst_22 = arith.constant dense<0.000000e+00> : vector<32x64xf32>
    %93 = tpu.matmul %91, %92, %cst_22 {dimension_numbers = #tpu.dot_dimension_numbers<[1], [0], [0], [1], [0, 0, 1, 1], [], []>} : vector<32x32xf32>, vector<32x64xf32>, vector<32x64xf32> -> vector<32x64xf32>
    %94 = vector.extract_strided_slice %85 {offsets = [32, 0], sizes = [32, 64], strides = [1, 1]} : vector<96x64xf32> to vector<32x64xf32>
    %cst_23 = arith.constant dense<0.000000e+00> : vector<32x64xf32>
    %95 = tpu.matmul %84, %94, %cst_23 {dimension_numbers = #tpu.dot_dimension_numbers<[1], [0], [0], [1], [0, 0, 1, 1], [], []>} : vector<32x32xf32>, vector<32x64xf32>, vector<32x64xf32> -> vector<32x64xf32>
    %96 = arith.addf %93, %95 : vector<32x64xf32>
    %c31_i32_24 = arith.constant 31 : i32
    %97 = tpu.dynamic_rotate %84 by %c31_i32_24 dim 0 : vector<32x32xf32>, i32 -> vector<32x32xf32>
    %cst_25 = arith.constant 0.000000e+00 : f32
    %98 = vector.shape_cast %6 : vector<32x1xi1> to vector<32x1xi1>
    %99 = vector.broadcast %98 : vector<32x1xi1> to vector<32x32xi1>
    %100 = vector.broadcast %cst_25 : f32 to vector<32x32xf32>
    %101 = arith.select %99, %100, %97 : vector<32x32xi1>, vector<32x32xf32>
    %102 = vector.extract_strided_slice %85 {offsets = [64, 0], sizes = [32, 64], strides = [1, 1]} : vector<96x64xf32> to vector<32x64xf32>
    %cst_26 = arith.constant dense<0.000000e+00> : vector<32x64xf32>
    %103 = tpu.matmul %101, %102, %cst_26 {dimension_numbers = #tpu.dot_dimension_numbers<[1], [0], [0], [1], [0, 0, 1, 1], [], []>} : vector<32x32xf32>, vector<32x64xf32>, vector<32x64xf32> -> vector<32x64xf32>
    %104 = arith.addf %96, %103 : vector<32x64xf32>
    %105 = vector.broadcast %86 : vector<1x64xf32> to vector<32x64xf32>
    %106 = arith.addf %104, %105 : vector<32x64xf32>
    %c9 = arith.constant 9 : index
    %c0_27 = arith.constant 0 : index
    %107 = vector.load %arg2[%c9, %c0_27] : memref<312x128xf32, #tpu.memory_space<vmem>>, vector<4x64xf32>
    %c13 = arith.constant 13 : index
    %c0_28 = arith.constant 0 : index
    %108 = vector.load %arg2[%c13, %c0_28] : memref<312x128xf32, #tpu.memory_space<vmem>>, vector<1x4xf32>
    %c9_29 = arith.constant 9 : index
    %c64_30 = arith.constant 64 : index
    %109 = vector.load %arg2[%c9_29, %c64_30] : memref<312x128xf32, #tpu.memory_space<vmem>>, vector<4x64xf32>
    %c8_31 = arith.constant 8 : index
    %c64_32 = arith.constant 64 : index
    %110 = vector.load %arg2[%c8_31, %c64_32] : memref<312x128xf32, #tpu.memory_space<vmem>>, vector<1x64xf32>
    %111 = vector.shape_cast %106 : vector<32x64xf32> to vector<2x16x64xf32>
    %cst_33 = arith.constant dense<0.000000e+00> : vector<2x64xf32>
    %112 = vector.multi_reduction <add>, %111, %cst_33 [1] : vector<2x16x64xf32> to vector<2x64xf32>
    %cst_34 = arith.constant 1.600000e+01 : f32
    %113 = vector.broadcast %cst_34 : f32 to vector<2x64xf32>
    %114 = arith.divf %112, %113 : vector<2x64xf32>
    %115 = vector.extract_strided_slice %107 {offsets = [0, 0], sizes = [1, 64], strides = [1, 1]} : vector<4x64xf32> to vector<1x64xf32>
    %116 = vector.broadcast %115 : vector<1x64xf32> to vector<2x64xf32>
    %117 = arith.mulf %114, %116 : vector<2x64xf32>
    %cst_35 = arith.constant dense<0.000000e+00> : vector<2xf32>
    %118 = vector.multi_reduction <add>, %117, %cst_35 [1] : vector<2x64xf32> to vector<2xf32>
    %119 = vector.shape_cast %118 : vector<2xf32> to vector<2x1xf32>
    %120 = vector.extract_strided_slice %108 {offsets = [0, 0], sizes = [1, 1], strides = [1, 1]} : vector<1x4xf32> to vector<1x1xf32>
    %121 = vector.broadcast %120 : vector<1x1xf32> to vector<2x1xf32>
    %122 = arith.addf %119, %121 : vector<2x1xf32>
    %cst_36 = arith.constant 0.000000e+00 : f32
    %123 = vector.broadcast %cst_36 : f32 to vector<2x1xf32>
    %124 = arith.maximumf %122, %123 : vector<2x1xf32>
    %125 = vector.extract_strided_slice %109 {offsets = [0, 0], sizes = [1, 64], strides = [1, 1]} : vector<4x64xf32> to vector<1x64xf32>
    %126 = vector.broadcast %124 : vector<2x1xf32> to vector<2x64xf32>
    %127 = vector.broadcast %125 : vector<1x64xf32> to vector<2x64xf32>
    %128 = arith.mulf %126, %127 : vector<2x64xf32>
    %129 = vector.extract_strided_slice %107 {offsets = [1, 0], sizes = [1, 64], strides = [1, 1]} : vector<4x64xf32> to vector<1x64xf32>
    %130 = vector.broadcast %129 : vector<1x64xf32> to vector<2x64xf32>
    %131 = arith.mulf %114, %130 : vector<2x64xf32>
    %cst_37 = arith.constant dense<0.000000e+00> : vector<2xf32>
    %132 = vector.multi_reduction <add>, %131, %cst_37 [1] : vector<2x64xf32> to vector<2xf32>
    %133 = vector.shape_cast %132 : vector<2xf32> to vector<2x1xf32>
    %134 = vector.extract_strided_slice %108 {offsets = [0, 1], sizes = [1, 1], strides = [1, 1]} : vector<1x4xf32> to vector<1x1xf32>
    %135 = vector.broadcast %134 : vector<1x1xf32> to vector<2x1xf32>
    %136 = arith.addf %133, %135 : vector<2x1xf32>
    %cst_38 = arith.constant 0.000000e+00 : f32
    %137 = vector.broadcast %cst_38 : f32 to vector<2x1xf32>
    %138 = arith.maximumf %136, %137 : vector<2x1xf32>
    %139 = vector.extract_strided_slice %109 {offsets = [1, 0], sizes = [1, 64], strides = [1, 1]} : vector<4x64xf32> to vector<1x64xf32>
    %140 = vector.broadcast %138 : vector<2x1xf32> to vector<2x64xf32>
    %141 = vector.broadcast %139 : vector<1x64xf32> to vector<2x64xf32>
    %142 = arith.mulf %140, %141 : vector<2x64xf32>
    %143 = arith.addf %128, %142 : vector<2x64xf32>
    %144 = vector.extract_strided_slice %107 {offsets = [2, 0], sizes = [1, 64], strides = [1, 1]} : vector<4x64xf32> to vector<1x64xf32>
    %145 = vector.broadcast %144 : vector<1x64xf32> to vector<2x64xf32>
    %146 = arith.mulf %114, %145 : vector<2x64xf32>
    %cst_39 = arith.constant dense<0.000000e+00> : vector<2xf32>
    %147 = vector.multi_reduction <add>, %146, %cst_39 [1] : vector<2x64xf32> to vector<2xf32>
    %148 = vector.shape_cast %147 : vector<2xf32> to vector<2x1xf32>
    %149 = vector.extract_strided_slice %108 {offsets = [0, 2], sizes = [1, 1], strides = [1, 1]} : vector<1x4xf32> to vector<1x1xf32>
    %150 = vector.broadcast %149 : vector<1x1xf32> to vector<2x1xf32>
    %151 = arith.addf %148, %150 : vector<2x1xf32>
    %cst_40 = arith.constant 0.000000e+00 : f32
    %152 = vector.broadcast %cst_40 : f32 to vector<2x1xf32>
    %153 = arith.maximumf %151, %152 : vector<2x1xf32>
    %154 = vector.extract_strided_slice %109 {offsets = [2, 0], sizes = [1, 64], strides = [1, 1]} : vector<4x64xf32> to vector<1x64xf32>
    %155 = vector.broadcast %153 : vector<2x1xf32> to vector<2x64xf32>
    %156 = vector.broadcast %154 : vector<1x64xf32> to vector<2x64xf32>
    %157 = arith.mulf %155, %156 : vector<2x64xf32>
    %158 = arith.addf %143, %157 : vector<2x64xf32>
    %159 = vector.extract_strided_slice %107 {offsets = [3, 0], sizes = [1, 64], strides = [1, 1]} : vector<4x64xf32> to vector<1x64xf32>
    %160 = vector.broadcast %159 : vector<1x64xf32> to vector<2x64xf32>
    %161 = arith.mulf %114, %160 : vector<2x64xf32>
    %cst_41 = arith.constant dense<0.000000e+00> : vector<2xf32>
    %162 = vector.multi_reduction <add>, %161, %cst_41 [1] : vector<2x64xf32> to vector<2xf32>
    %163 = vector.shape_cast %162 : vector<2xf32> to vector<2x1xf32>
    %164 = vector.extract_strided_slice %108 {offsets = [0, 3], sizes = [1, 1], strides = [1, 1]} : vector<1x4xf32> to vector<1x1xf32>
    %165 = vector.broadcast %164 : vector<1x1xf32> to vector<2x1xf32>
    %166 = arith.addf %163, %165 : vector<2x1xf32>
    %cst_42 = arith.constant 0.000000e+00 : f32
    %167 = vector.broadcast %cst_42 : f32 to vector<2x1xf32>
    %168 = arith.maximumf %166, %167 : vector<2x1xf32>
    %169 = vector.extract_strided_slice %109 {offsets = [3, 0], sizes = [1, 64], strides = [1, 1]} : vector<4x64xf32> to vector<1x64xf32>
    %170 = vector.broadcast %168 : vector<2x1xf32> to vector<2x64xf32>
    %171 = vector.broadcast %169 : vector<1x64xf32> to vector<2x64xf32>
    %172 = arith.mulf %170, %171 : vector<2x64xf32>
    %173 = arith.addf %158, %172 : vector<2x64xf32>
    %174 = vector.broadcast %110 : vector<1x64xf32> to vector<2x64xf32>
    %175 = arith.addf %173, %174 : vector<2x64xf32>
    %176 = arith.negf %175 : vector<2x64xf32>
    %177 = math.exp %176 : vector<2x64xf32>
    %cst_43 = arith.constant 1.000000e+00 : f32
    %178 = vector.broadcast %cst_43 : f32 to vector<2x64xf32>
    %179 = arith.addf %178, %177 : vector<2x64xf32>
    %180 = arith.divf %178, %179 : vector<2x64xf32>
    %181 = vector.shape_cast %180 : vector<2x64xf32> to vector<2x1x64xf32>
    %182 = vector.broadcast %181 : vector<2x1x64xf32> to vector<2x16x64xf32>
    %183 = arith.mulf %111, %182 : vector<2x16x64xf32>
    %184 = vector.shape_cast %183 : vector<2x16x64xf32> to vector<32x64xf32>
    %cst_44 = arith.constant 0.000000e+00 : f32
    %185 = vector.broadcast %cst_44 : f32 to vector<32x64xf32>
    %186 = arith.maximumf %184, %185 : vector<32x64xf32>
    %c120 = arith.constant 120 : index
    %c0_45 = arith.constant 0 : index
    %187 = vector.load %arg2[%c120, %c0_45] : memref<312x128xf32, #tpu.memory_space<vmem>>, vector<192x128xf32>
    %c16 = arith.constant 16 : index
    %c0_46 = arith.constant 0 : index
    %188 = vector.load %arg2[%c16, %c0_46] : memref<312x128xf32, #tpu.memory_space<vmem>>, vector<1x128xf32>
    %c1_i32_47 = arith.constant 1 : i32
    %189 = tpu.dynamic_rotate %186 by %c1_i32_47 dim 0 : vector<32x64xf32>, i32 -> vector<32x64xf32>
    %cst_48 = arith.constant 0.000000e+00 : f32
    %190 = vector.shape_cast %4 : vector<32x1xi1> to vector<32x1xi1>
    %191 = vector.broadcast %190 : vector<32x1xi1> to vector<32x64xi1>
    %192 = vector.broadcast %cst_48 : f32 to vector<32x64xf32>
    %193 = arith.select %191, %192, %189 : vector<32x64xi1>, vector<32x64xf32>
    %194 = vector.extract_strided_slice %187 {offsets = [0, 0], sizes = [64, 128], strides = [1, 1]} : vector<192x128xf32> to vector<64x128xf32>
    %cst_49 = arith.constant dense<0.000000e+00> : vector<32x128xf32>
    %195 = tpu.matmul %193, %194, %cst_49 {dimension_numbers = #tpu.dot_dimension_numbers<[1], [0], [0], [1], [0, 0, 1, 1], [], []>} : vector<32x64xf32>, vector<64x128xf32>, vector<32x128xf32> -> vector<32x128xf32>
    %196 = vector.extract_strided_slice %187 {offsets = [64, 0], sizes = [64, 128], strides = [1, 1]} : vector<192x128xf32> to vector<64x128xf32>
    %cst_50 = arith.constant dense<0.000000e+00> : vector<32x128xf32>
    %197 = tpu.matmul %186, %196, %cst_50 {dimension_numbers = #tpu.dot_dimension_numbers<[1], [0], [0], [1], [0, 0, 1, 1], [], []>} : vector<32x64xf32>, vector<64x128xf32>, vector<32x128xf32> -> vector<32x128xf32>
    %198 = arith.addf %195, %197 : vector<32x128xf32>
    %c31_i32_51 = arith.constant 31 : i32
    %199 = tpu.dynamic_rotate %186 by %c31_i32_51 dim 0 : vector<32x64xf32>, i32 -> vector<32x64xf32>
    %cst_52 = arith.constant 0.000000e+00 : f32
    %200 = vector.shape_cast %6 : vector<32x1xi1> to vector<32x1xi1>
    %201 = vector.broadcast %200 : vector<32x1xi1> to vector<32x64xi1>
    %202 = vector.broadcast %cst_52 : f32 to vector<32x64xf32>
    %203 = arith.select %201, %202, %199 : vector<32x64xi1>, vector<32x64xf32>
    %204 = vector.extract_strided_slice %187 {offsets = [128, 0], sizes = [64, 128], strides = [1, 1]} : vector<192x128xf32> to vector<64x128xf32>
    %cst_53 = arith.constant dense<0.000000e+00> : vector<32x128xf32>
    %205 = tpu.matmul %203, %204, %cst_53 {dimension_numbers = #tpu.dot_dimension_numbers<[1], [0], [0], [1], [0, 0, 1, 1], [], []>} : vector<32x64xf32>, vector<64x128xf32>, vector<32x128xf32> -> vector<32x128xf32>
    %206 = arith.addf %198, %205 : vector<32x128xf32>
    %207 = vector.broadcast %188 : vector<1x128xf32> to vector<32x128xf32>
    %208 = arith.addf %206, %207 : vector<32x128xf32>
    %cst_54 = arith.constant 0.000000e+00 : f32
    %209 = vector.broadcast %cst_54 : f32 to vector<32x128xf32>
    %210 = arith.maximumf %208, %209 : vector<32x128xf32>
    %211 = vector.shape_cast %210 : vector<32x128xf32> to vector<2x16x128xf32>
    %cst_55 = arith.constant dense<0.000000e+00> : vector<2x128xf32>
    %212 = vector.multi_reduction <add>, %211, %cst_55 [1] : vector<2x16x128xf32> to vector<2x128xf32>
    %cst_56 = arith.constant 1.600000e+01 : f32
    %213 = vector.broadcast %cst_56 : f32 to vector<2x128xf32>
    %214 = arith.divf %212, %213 : vector<2x128xf32>
    %c17 = arith.constant 17 : index
    %c0_57 = arith.constant 0 : index
    %215 = vector.load %arg2[%c17, %c0_57] : memref<312x128xf32, #tpu.memory_space<vmem>>, vector<2x128xf32>
    %216 = vector.shape_cast %214 : vector<2x128xf32> to vector<2x1x128xf32>
    %217 = vector.shape_cast %215 : vector<2x128xf32> to vector<1x2x128xf32>
    %218 = vector.broadcast %216 : vector<2x1x128xf32> to vector<2x2x128xf32>
    %219 = vector.broadcast %217 : vector<1x2x128xf32> to vector<2x2x128xf32>
    %220 = arith.mulf %218, %219 : vector<2x2x128xf32>
    %cst_58 = arith.constant dense<0.000000e+00> : vector<2x2xf32>
    %221 = vector.multi_reduction <add>, %220, %cst_58 [2] : vector<2x2x128xf32> to vector<2x2xf32>
    %c19 = arith.constant 19 : index
    %c0_59 = arith.constant 0 : index
    %222 = vector.load %arg2[%c19, %c0_59] : memref<312x128xf32, #tpu.memory_space<vmem>>, vector<1x2xf32>
    %223 = vector.broadcast %222 : vector<1x2xf32> to vector<2x2xf32>
    %224 = arith.addf %221, %223 : vector<2x2xf32>
    %c0_60 = arith.constant 0 : index
    %c0_61 = arith.constant 0 : index
    %225 = vector.load %arg3[%c0_60, %c0_61] : memref<2x2xf32, #tpu.memory_space<vmem>>, vector<2x2xf32>
    tpu.vector_store %arg3[%c0_60, %c0_61], %224 {strides = array<i32>} : memref<2x2xf32, #tpu.memory_space<vmem>>, vector<2x2xf32>,
    return
  }
  func.func @transform_0(%arg0: i32) -> (i32, i32) {
    %c0_i32 = arith.constant 0 : i32
    %c0_i32_0 = arith.constant 0 : i32
    %c0_i32_1 = arith.constant 0 : i32
    return %c0_i32, %c0_i32_0 : i32, i32
  }
  func.func @transform_1(%arg0: i32) -> (i32, i32) {
    %c0_i32 = arith.constant 0 : i32
    %c0_i32_0 = arith.constant 0 : i32
    %c0_i32_1 = arith.constant 0 : i32
    return %c0_i32, %c0_i32_0 : i32, i32
  }
  func.func @transform_2(%arg0: i32) -> (i32, i32) {
    %c0_i32 = arith.constant 0 : i32
    %c0_i32_0 = arith.constant 0 : i32
    %c0_i32_1 = arith.constant 0 : i32
    return %c0_i32, %c0_i32_0 : i32, i32
  }
}

</mosaic_0001>

<llo_original>
// kernel: tpu_custom_call.1
$region0: #{tpu_custom_call.1}
  #allocation0 [shape = 'u32[]', space=smem, size = 0x4, offset = 0x4, fixed_abs, tag = 'smem constant byte address 0x4 - core index']
  #allocation1 [shape = 'u32[144,128]{1,0:T(1,128)}', space=vmem, size = 0x12000, scoped, tag = 'internal scratch']
  %s0 = inlined_call_operand.vmem [shape: f32[32,1], index: 0, kind: input, shape index: {}]
  %s1 = inlined_call_operand.hbm [shape: f32[312,128], index: 1, kind: input, shape index: {}]
  %s2 = inlined_call_operand.hbm [shape: f32[2,2], index: 2, kind: output, shape index: {}]
  %s3 = sld [smem:[#allocation0]]
  $region22: #{tpu_custom_call.1} parent=0
    _
  %s5 = ssub.s32 1, %s3
  %s6 = scalar_select 0, %s5, %s3
  $region1: #{tpu_custom_call.1} parent=0
    #allocation2 [shape = 'u8[159744]{0}', space=vmem, size = 0x27000, scoped, tag = 'input window, operand 1, single buffered']
    #allocation3 [shape = 's32[1]{0}', space=sflag, size = 0x4, scoped, tag = 'scoped memory for tpu_custom_call.1']
    #allocation4 [shape = 's32[1]{0}', space=sflag, size = 0x4, scoped, tag = 'scoped memory for tpu_custom_call.1']
    #allocation5 [shape = 'u8[1024]{0}', space=vmem, size = 0x400, scoped, tag = 'output window, operand 0, single buffered']
    %7 = vsyncpa [#allocation3], 0
    %8 = vsyncpa [#allocation4], 0
    // Predicated region
    $region2: #{tpu_custom_call.1} parent=1 // pred_check
      _
    $region3: #{tpu_custom_call.1} parent=1 // pred_check_branch
      %10 = sbr.rel (0) target = $region5
    $region4: #{tpu_custom_call.1} parent=1 // pred_region
      _
    $region5: #{tpu_custom_call.1} parent=1 // pred_fallthru
      _
    // Predicated region
    $region6: #{tpu_custom_call.1} parent=1 // pred_check
      _
    $region7: #{tpu_custom_call.1} parent=1 // pred_check_branch
      %12 = sbr.rel (0) target = $region9
    $region8: #{tpu_custom_call.1} parent=1 // pred_region
      %s14 = ssub.s32 4992, 4992
      %15 = vsyncadd [#allocation3], %s14
      %s16 = sshll.u32 [#allocation2], 4
      %s17 = int_to_ptr.vmem [resolvable:$true] %s16
      %22 = dma.hbm_to_vmem [thread:$0]  %s1, 4992, %s17, [#allocation3], 128, 128, 8
    $region9: #{tpu_custom_call.1} parent=1 // pred_fallthru
      _
    // Predicated region
    $region10: #{tpu_custom_call.1} parent=1 // pred_check
      _
    $region11: #{tpu_custom_call.1} parent=1 // pred_check_branch
      %24 = sbr.rel (0) target = $region13
    $region12: #{tpu_custom_call.1} parent=1 // pred_region
      %25 = dma.done [#allocation3], 4992
    $region13: #{tpu_custom_call.1} parent=1 // pred_fallthru
      _
    %v26 = vlaneseq
    %v27 = vshrl.u32 %v26, 7
    %v28 = vadd.s32 %v27, 8
    %v29 = vadd.s32 %v27, 16
    %v30 = vadd.s32 %v27, 24
    %v31 = vand.u32 %v27, 15
    %v32 = vand.u32 %v28, 15
    %v33 = vand.u32 %v29, 15
    %v34 = vand.u32 %v30, 15
    %vm35 = vcmp.eq.s32.totalorder %v31, 0
    %vm36 = vcmp.eq.s32.totalorder %v32, 0
    %vm37 = vcmp.eq.s32.totalorder %v33, 0
    %vm38 = vcmp.eq.s32.totalorder %v34, 0
    %vm39 = vcmp.eq.s32.totalorder %v31, 15
    %vm40 = vcmp.eq.s32.totalorder %v32, 15
    %vm41 = vcmp.eq.s32.totalorder %v33, 15
    %vm42 = vcmp.eq.s32.totalorder %v34, 15
    %v43 = vld [vmem:[%s0] sm:$0xff]
    %v44 = vld [vmem:[%s0 + $0x8] sm:$0xff]
    %v45 = vld [vmem:[%s0 + $0x10] sm:$0xff]
    %v46 = vld [vmem:[%s0 + $0x18] sm:$0xff]
    %v47 = vld [vmem:[#allocation2] sm:$0x7]
    %49 = vset.pattern.permute.xlu0 0
    %50 = vperm.xlu0 %49, %v43
    %v51 = vpop.permute.xlu0 %50
    %54 = vset.pattern.permute.xlu0 0
    %55 = vperm.xlu0 %54, %v44
    %v56 = vpop.permute.xlu0 %55
    %59 = vset.pattern.permute.xlu0 0
    %60 = vperm.xlu0 %59, %v45
    %v61 = vpop.permute.xlu0 %60
    %64 = vset.pattern.permute.xlu0 0
    %65 = vperm.xlu0 %64, %v46
    %v66 = vpop.permute.xlu0 %65
    %v68 = vrot.slane %v51, 7
    %v69 = vrot.slane %v56, 7
    %v70 = vrot.slane %v61, 7
    %v71 = vrot.slane %v66, 7
    %vm72 = vcmp.lt.s32.totalorder %v27, 1
    %v73 = vsel %vm72, %v70, %v71
    %v74 = vsel %vm72, %v69, %v70
    %v75 = vsel %vm72, %v68, %v69
    %v76 = vsel %vm72, %v71, %v68
    %v77 = vsel %vm35, 1, 0
    %v78 = vsel %vm36, 1, 0
    %v79 = vsel %vm37, 1, 0
    %v80 = vsel %vm38, 1, 0
    %vm81 = vcmp.eq.s32.totalorder %v77, 1
    %vm82 = vcmp.eq.s32.totalorder %v78, 1
    %vm83 = vcmp.eq.s32.totalorder %v79, 1
    %vm84 = vcmp.eq.s32.totalorder %v80, 1
    %v85 = vsel %vm81, 0.0, %v76
    %v86 = vsel %vm82, 0.0, %v75
    %v87 = vsel %vm83, 0.0, %v74
    %v88 = vsel %vm84, 0.0, %v73
    %v89 = vlaneseq
    %v90 = vshrl.u32 %v89, 7
    %v91 = vsub.s32 0, %v90
    %v92 = vrot.slane %v47, %v91
    %v93 = vmul.f32 %v85, %v92
    %v94 = vmul.f32 %v86, %v92
    %v95 = vmul.f32 %v87, %v92
    %v96 = vmul.f32 %v88, %v92
    %v97 = vlaneseq
    %v98 = vshrl.u32 %v97, 7
    %v99 = vsub.s32 1, %v98
    %v100 = vrot.slane %v47, %v99
    %v101 = vmul.f32 %v51, %v100
    %v102 = vmul.f32 %v56, %v100
    %v103 = vmul.f32 %v61, %v100
    %v104 = vmul.f32 %v66, %v100
    %v105 = vadd.f32 %v93, %v101
    %v106 = vadd.f32 %v94, %v102
    %v107 = vadd.f32 %v95, %v103
    %v108 = vadd.f32 %v96, %v104
    %v109 = vrot.slane %v51, 1
    %v110 = vrot.slane %v56, 1
    %v111 = vrot.slane %v61, 1
    %v112 = vrot.slane %v66, 1
    %vm113 = vcmp.lt.s32.totalorder %v27, 7
    %v114 = vsel %vm113, %v111, %v112
    %v115 = vsel %vm113, %v110, %v111
    %v116 = vsel %vm113, %v109, %v110
    %v117 = vsel %vm113, %v112, %v109
    %v118 = vsel %vm39, 1, 0
    %v119 = vsel %vm40, 1, 0
    %v120 = vsel %vm41, 1, 0
    %v121 = vsel %vm42, 1, 0
    %vm122 = vcmp.eq.s32.totalorder %v118, 1
    %vm123 = vcmp.eq.s32.totalorder %v119, 1
    %vm124 = vcmp.eq.s32.totalorder %v120, 1
    %vm125 = vcmp.eq.s32.totalorder %v121, 1
    %v126 = vsel %vm122, 0.0, %v116
    %v127 = vsel %vm123, 0.0, %v115
    %v128 = vsel %vm124, 0.0, %v114
    %v129 = vsel %vm125, 0.0, %v117
    %v130 = vlaneseq
    %v131 = vshrl.u32 %v130, 7
    %v132 = vsub.s32 2, %v131
    %v133 = vrot.slane %v47, %v132
    %v134 = vmul.f32 %v126, %v133
    %v135 = vmul.f32 %v127, %v133
    %v136 = vmul.f32 %v128, %v133
    %v137 = vmul.f32 %v129, %v133
    %v138 = vadd.f32 %v105, %v134
    %v139 = vadd.f32 %v106, %v135
    %v140 = vadd.f32 %v107, %v136
    %v141 = vadd.f32 %v108, %v137
    %v142 = vld [vmem:[#allocation2 + $0x3] sm:$0x1]
    %v143 = vlaneseq
    %v144 = vshrl.u32 %v143, 7
    %v145 = vsub.s32 0, %v144
    %v146 = vrot.slane %v142, %v145
    %v147 = vadd.f32 %v138, %v146
    %v148 = vadd.f32 %v139, %v146
    %v149 = vadd.f32 %v140, %v146
    %v150 = vadd.f32 %v141, %v146
    %v151 = vld [vmem:[#allocation2 + $0x4] sm:$0x3]
    %v152 = vld [vmem:[#allocation2 + $0x6] sm:$0x3]
    %vm153 = vcmask 261120
    %v154 = vsel %vm153, %v147, 0.0
    %v155 = vsel %vm153, %v148, 0.0
    %v156 = vadd.f32 %v154, %v155
    %v157 = vrot.slane %v156, 4
    %v158 = vadd.f32 %v156, %v157
    %v159 = vrot.slane %v158, 2
    %v160 = vadd.f32 %v158, %v159
    %v161 = vrot.slane %v160, 1
    %v162 = vadd.f32 %v160, %v161
    %v163 = vsel %vm153, %v149, 0.0
    %v164 = vsel %vm153, %v150, 0.0
    %v165 = vadd.f32 %v163, %v164
    %v166 = vrot.slane %v165, 4
    %v167 = vadd.f32 %v165, %v166
    %v168 = vrot.slane %v167, 2
    %v169 = vadd.f32 %v167, %v168
    %v170 = vrot.slane %v169, 1
    %v171 = vadd.f32 %v169, %v170
    %v172 = vrcp.pop 16.0
    %v173 = vmul.f32 %v162, %v172
    %v174 = vmul.f32 %v171, %v172
    %v175 = vlaneseq
    %v176 = vshrl.u32 %v175, 7
    %v177 = vsub.s32 0, %v176
    %v178 = vrot.slane %v151, %v177
    %v179 = vmul.f32 %v173, %v178
    %v180 = vmul.f32 %v174, %v178
    %v183 = vrot.slane %v180, 7
    %vm184 = vcmask 1041409
    %v185 = vsel %vm184, %v183, %v179
    %vm187 = vcmask 254976
    %v188 = vsel %vm187, %v185, 0.0
    %189 = vadd.xlane.f32.xlu0 %v188
    %v190 = vpop.xlane.xlu0 %189
    %v191 = vadd.f32 %v190, %v146
    %v192 = vmax.f32 %v191, 0.0
    %194 = vset.pattern.permute.xlu0 64
    %195 = vperm.xlu0 %194, %v192
    %v196 = vpop.permute.xlu0 %195
    %v198 = vlaneseq
    %v199 = vshrl.u32 %v198, 7
    %v200 = vsub.s32 0, %v199
    %v201 = vrot.slane %v152, %v200
    %v202 = vmul.f32 %v196, %v201
    %v203 = vlaneseq
    %v204 = vshrl.u32 %v203, 7
    %v205 = vsub.s32 1, %v204
    %v206 = vrot.slane %v151, %v205
    %v207 = vmul.f32 %v173, %v206
    %v208 = vmul.f32 %v174, %v206
    %v211 = vrot.slane %v208, 7
    %v212 = vsel %vm184, %v211, %v207
    %v214 = vsel %vm187, %v212, 0.0
    %215 = vadd.xlane.f32.xlu0 %v214
    %v216 = vpop.xlane.xlu0 %215
    %v217 = vadd.f32 %v216, %v146
    %v218 = vmax.f32 %v217, 0.0
    %220 = vset.pattern.permute.xlu0 65
    %221 = vperm.xlu0 %220, %v218
    %v222 = vpop.permute.xlu0 %221
    %v224 = vlaneseq
    %v225 = vshrl.u32 %v224, 7
    %v226 = vsub.s32 1, %v225
    %v227 = vrot.slane %v152, %v226
    %v228 = vmul.f32 %v222, %v227
    %v229 = vadd.f32 %v202, %v228
    %231 = vrot.lane.b32.xlu0 %v146, 96
    %v232 = vpop.permute.xlu0 %231
    %v234 = vadd.f32 %v229, %v232
    %v235 = vxor.u32 %v234, 2147483648
    %v236 = vmul.f32 %v235, 1.442695
    %v237 = vpow.pop %v236
    %v238 = vadd.f32 %v237, 1.0
    %v239 = vrcp.pop %v238
    %v240 = vmul.f32 1.0, %v239
    %v243 = vunpack.c.l.s4 1966171168
    %v244 = vunpack.c.0.s8 %v243
    %v245 = vlaneseq
    %v246 = vshrl.u32 %v245, 7
    %v247 = vsub.s32 %v244, %v246
    %v248 = vrot.slane %v240, %v247
    %v249 = vcombine.high %v248, %v248
    %v251 = vunpack.c.l.s4 1966171168
    %v252 = vunpack.c.0.s8 %v251
    %v253 = vlaneseq
    %v254 = vshrl.u32 %v253, 7
    %v255 = vsub.s32 %v252, %v254
    %v256 = vrot.slane %v248, %v255
    %v258 = vunpack.c.l.s4 1966171168
    %v259 = vunpack.c.0.s8 %v258
    %v260 = vlaneseq
    %v261 = vshrl.u32 %v260, 7
    %v262 = vsub.s32 %v259, %v261
    %v263 = vrot.slane %v249, %v262
    %v264 = vlaneseq
    %v265 = vshrl.u32 %v264, 7
    %v266 = vsub.s32 0, %v265
    %v267 = vrot.slane %v256, %v266
    %v268 = vlaneseq
    %v269 = vshrl.u32 %v268, 7
    %v270 = vsub.s32 0, %v269
    %v271 = vrot.slane %v263, %v270
    %v274 = vmul.f32 %v147, %v267
    %v275 = vmul.f32 %v148, %v267
    %v276 = vmul.f32 %v149, %v271
    %v277 = vmul.f32 %v150, %v271
    %v278 = vmax.f32 %v274, 0.0
    %v279 = vmax.f32 %v275, 0.0
    %v280 = vmax.f32 %v276, 0.0
    %v281 = vmax.f32 %v277, 0.0
    %v282 = vld [vmem:[#allocation2 + $0x18] sm:$0xff]
    %v283 = vld [vmem:[#allocation2 + $0x20] sm:$0xff]
    %v284 = vld [vmem:[#allocation2 + $0x28] sm:$0xff]
    %v285 = vld [vmem:[#allocation2 + $0x30] sm:$0xff]
    %v286 = vld [vmem:[#allocation2 + $0x38] sm:$0xff]
    %v287 = vld [vmem:[#allocation2 + $0x40] sm:$0xff]
    %v288 = vld [vmem:[#allocation2 + $0x48] sm:$0xff]
    %v289 = vld [vmem:[#allocation2 + $0x50] sm:$0xff]
    %v290 = vld [vmem:[#allocation2 + $0x58] sm:$0xff]
    %v291 = vld [vmem:[#allocation2 + $0x60] sm:$0xff]
    %v292 = vld [vmem:[#allocation2 + $0x68] sm:$0xff]
    %v293 = vld [vmem:[#allocation2 + $0x70] sm:$0xff]
    %v294 = vld [vmem:[#allocation2 + $0x8] sm:$0x1]
    %v295 = vrot.slane %v278, 7
    %v296 = vrot.slane %v279, 7
    %v297 = vrot.slane %v280, 7
    %v298 = vrot.slane %v281, 7
    %v299 = vsel %vm72, %v297, %v298
    %v300 = vsel %vm72, %v296, %v297
    %v301 = vsel %vm72, %v295, %v296
    %v302 = vsel %vm72, %v298, %v295
    %v303 = vsel %vm81, 0.0, %v302
    %v304 = vsel %vm82, 0.0, %v301
    %v305 = vsel %vm83, 0.0, %v300
    %v306 = vsel %vm84, 0.0, %v299
    %v308 = vsel %vm153, %v278, 0
    %v311 = vsel %vm153, %v279, 0
    %v314 = vsel %vm153, %v280, 0
    %v317 = vsel %vm153, %v281, 0
    %319 = vmatprep.subr.mxu0 0.0
    %320 = vmatpush1.msra.mxu0 %v286
    %321 = vmatprep.subr.mxu0 0.0
    %322 = vmatpush1.msra.mxu0 %v287
    %323 = vmatprep.subr.mxu0 0.0
    %324 = vmatpush1.msra.mxu0 %v288
    %325 = vmatprep.subr.mxu0 0.0
    %326 = vmatpush1.msra.mxu0 %v289
    %327 = vmatprep.subr.mxu0 0.0
    %328 = vmatpush1.msra.mxu0 0.0
    %329 = vmatprep.subr.mxu0 0.0
    %330 = vmatpush1.msra.mxu0 0.0
    %331 = vmatprep.subr.mxu0 0.0
    %332 = vmatpush1.msra.mxu0 0.0
    %333 = vmatprep.subr.mxu0 0.0
    %334 = vmatpush1.msra.mxu0 0.0
    %335 = vmatprep.subr.mxu0 0.0
    %336 = vmatpush1.msra.mxu0 0.0
    %337 = vmatprep.subr.mxu0 0.0
    %338 = vmatpush1.msra.mxu0 0.0
    %339 = vmatprep.subr.mxu0 0.0
    %340 = vmatpush1.msra.mxu0 0.0
    %341 = vmatprep.subr.mxu0 0.0
    %342 = vmatpush1.msra.mxu0 0.0
    %343 = vmatprep.subr.mxu0 0.0
    %344 = vmatpush1.msra.mxu0 0.0
    %345 = vmatprep.subr.mxu0 0.0
    %346 = vmatpush1.msra.mxu0 0.0
    %347 = vmatprep.subr.mxu0 0.0
    %348 = vmatpush1.msra.mxu0 0.0
    %349 = vmatprep.subr.mxu0 0.0
    %350 = vmatpush1.msra.mxu0 0.0
    %351 = vmatprep.subr.mxu0 0.0
    %352 = vmatpush1.msra.mxu0 0.0
    %353 = vmatprep.subr.mxu0 0.0
    %354 = vmatpush1.msra.mxu0 0.0
    %355 = vmatprep.subr.mxu0 0.0
    %356 = vmatpush1.msra.mxu0 0.0
    %357 = vmatprep.subr.mxu0 0.0
    %358 = vmatpush1.msra.mxu0 0.0
    %359 = vmatprep.subr.mxu0 0.0
    %360 = vmatpush1.msra.mxu0 0.0
    %361 = vmatprep.subr.mxu0 0.0
    %362 = vmatpush1.msra.mxu0 0.0
    %363 = vmatprep.subr.mxu0 0.0
    %364 = vmatpush1.msra.mxu0 0.0
    %365 = vmatprep.subr.mxu0 0.0
    %366 = vmatpush1.msra.mxu0 0.0
    %367 = vmatprep.subr.mxu0 0.0
    %368 = vmatpush1.msra.mxu0 0.0
    %369 = vmatprep.subr.mxu0 0.0
    %370 = vmatpush1.msra.mxu0 0.0
    %371 = vmatprep.subr.mxu0 0.0
    %372 = vmatpush1.msra.mxu0 0.0
    %373 = vmatprep.subr.mxu0 0.0
    %374 = vmatpush1.msra.mxu0 0.0
    %375 = vmatprep.subr.mxu0 0.0
    %376 = vmatpush1.msra.mxu0 0.0
    %377 = vmatprep.subr.mxu0 0.0
    %378 = vmatpush1.msra.mxu0 0.0
    %379 = vmatprep.subr.mxu0 0.0
    %380 = vmatpush1.msra.mxu0 0.0
    %381 = vmatprep.subr.mxu0 0.0
    %382 = vmatpush1.msra.mxu0 0.0
    %383 = vmatprep.mubr.f32.mxu0 0.0
    %384 = vmatmul.mubr.f32.gmra.mrb[0].mxu0 %v308
    %v385 = vpop.f32.mrb[0].mxu0
    %v386 = vadd.f32 0.0, %v385
    %v387 = vpop.f32.mrb[0].mxu0
    %388 = vmatprep.mubr.f32.mxu0 0.0
    %389 = vmatmul.mubr.f32.gmra.mrb[0].mxu0 %v311
    %v390 = vpop.f32.mrb[0].mxu0
    %v391 = vadd.f32 0.0, %v390
    %v392 = vpop.f32.mrb[0].mxu0
    %393 = vmatprep.mubr.f32.mxu0 0.0
    %394 = vmatmul.mubr.f32.gmra.mrb[0].mxu0 %v314
    %v395 = vpop.f32.mrb[0].mxu0
    %v396 = vadd.f32 0.0, %v395
    %v397 = vpop.f32.mrb[0].mxu0
    %398 = vmatprep.mubr.f32.mxu0 0.0
    %399 = vmatmul.mubr.f32.gmra.mrb[0].mxu0 %v317
    %v400 = vpop.f32.mrb[0].mxu0
    %v401 = vadd.f32 0.0, %v400
    %v402 = vpop.f32.mrb[0].mxu0
    %403 = vdwg.mxu0
    %v405 = vsel %vm153, %v303, 0
    %v408 = vsel %vm153, %v304, 0
    %v411 = vsel %vm153, %v305, 0
    %v414 = vsel %vm153, %v306, 0
    %416 = vmatprep.subr.mxu0 0.0
    %417 = vmatpush1.msra.mxu0 %v282
    %418 = vmatprep.subr.mxu0 0.0
    %419 = vmatpush1.msra.mxu0 %v283
    %420 = vmatprep.subr.mxu0 0.0
    %421 = vmatpush1.msra.mxu0 %v284
    %422 = vmatprep.subr.mxu0 0.0
    %423 = vmatpush1.msra.mxu0 %v285
    %424 = vmatprep.subr.mxu0 0.0
    %425 = vmatpush1.msra.mxu0 0.0
    %426 = vmatprep.subr.mxu0 0.0
    %427 = vmatpush1.msra.mxu0 0.0
    %428 = vmatprep.subr.mxu0 0.0
    %429 = vmatpush1.msra.mxu0 0.0
    %430 = vmatprep.subr.mxu0 0.0
    %431 = vmatpush1.msra.mxu0 0.0
    %432 = vmatprep.subr.mxu0 0.0
    %433 = vmatpush1.msra.mxu0 0.0
    %434 = vmatprep.subr.mxu0 0.0
    %435 = vmatpush1.msra.mxu0 0.0
    %436 = vmatprep.subr.mxu0 0.0
    %437 = vmatpush1.msra.mxu0 0.0
    %438 = vmatprep.subr.mxu0 0.0
    %439 = vmatpush1.msra.mxu0 0.0
    %440 = vmatprep.subr.mxu0 0.0
    %441 = vmatpush1.msra.mxu0 0.0
    %442 = vmatprep.subr.mxu0 0.0
    %443 = vmatpush1.msra.mxu0 0.0
    %444 = vmatprep.subr.mxu0 0.0
    %445 = vmatpush1.msra.mxu0 0.0
    %446 = vmatprep.subr.mxu0 0.0
    %447 = vmatpush1.msra.mxu0 0.0
    %448 = vmatprep.subr.mxu0 0.0
    %449 = vmatpush1.msra.mxu0 0.0
    %450 = vmatprep.subr.mxu0 0.0
    %451 = vmatpush1.msra.mxu0 0.0
    %452 = vmatprep.subr.mxu0 0.0
    %453 = vmatpush1.msra.mxu0 0.0
    %454 = vmatprep.subr.mxu0 0.0
    %455 = vmatpush1.msra.mxu0 0.0
    %456 = vmatprep.subr.mxu0 0.0
    %457 = vmatpush1.msra.mxu0 0.0
    %458 = vmatprep.subr.mxu0 0.0
    %459 = vmatpush1.msra.mxu0 0.0
    %460 = vmatprep.subr.mxu0 0.0
    %461 = vmatpush1.msra.mxu0 0.0
    %462 = vmatprep.subr.mxu0 0.0
    %463 = vmatpush1.msra.mxu0 0.0
    %464 = vmatprep.subr.mxu0 0.0
    %465 = vmatpush1.msra.mxu0 0.0
    %466 = vmatprep.subr.mxu0 0.0
    %467 = vmatpush1.msra.mxu0 0.0
    %468 = vmatprep.subr.mxu0 0.0
    %469 = vmatpush1.msra.mxu0 0.0
    %470 = vmatprep.subr.mxu0 0.0
    %471 = vmatpush1.msra.mxu0 0.0
    %472 = vmatprep.subr.mxu0 0.0
    %473 = vmatpush1.msra.mxu0 0.0
    %474 = vmatprep.subr.mxu0 0.0
    %475 = vmatpush1.msra.mxu0 0.0
    %476 = vmatprep.subr.mxu0 0.0
    %477 = vmatpush1.msra.mxu0 0.0
    %478 = vmatprep.subr.mxu0 0.0
    %479 = vmatpush1.msra.mxu0 0.0
    %480 = vmatprep.mubr.f32.mxu0 0.0
    %481 = vmatmul.mubr.f32.gmra.mrb[0].mxu0 %v405
    %v482 = vpop.f32.mrb[0].mxu0
    %v483 = vadd.f32 %v386, %v482
    %v484 = vpop.f32.mrb[0].mxu0
    %485 = vmatprep.mubr.f32.mxu0 0.0
    %486 = vmatmul.mubr.f32.gmra.mrb[0].mxu0 %v408
    %v487 = vpop.f32.mrb[0].mxu0
    %v488 = vadd.f32 %v391, %v487
    %v489 = vpop.f32.mrb[0].mxu0
    %490 = vmatprep.mubr.f32.mxu0 0.0
    %491 = vmatmul.mubr.f32.gmra.mrb[0].mxu0 %v411
    %v492 = vpop.f32.mrb[0].mxu0
    %v493 = vadd.f32 %v396, %v492
    %v494 = vpop.f32.mrb[0].mxu0
    %495 = vmatprep.mubr.f32.mxu0 0.0
    %496 = vmatmul.mubr.f32.gmra.mrb[0].mxu0 %v414
    %v497 = vpop.f32.mrb[0].mxu0
    %v498 = vadd.f32 %v401, %v497
    %v499 = vpop.f32.mrb[0].mxu0
    %500 = vdwg.mxu0
    %v501 = vrot.slane %v278, 1
    %v502 = vrot.slane %v279, 1
    %v503 = vrot.slane %v280, 1
    %v504 = vrot.slane %v281, 1
    %v505 = vsel %vm113, %v503, %v504
    %v506 = vsel %vm113, %v502, %v503
    %v507 = vsel %vm113, %v501, %v502
    %v508 = vsel %vm113, %v504, %v501
    %v509 = vsel %vm122, 0.0, %v507
    %v510 = vsel %vm123, 0.0, %v506
    %v511 = vsel %vm124, 0.0, %v505
    %v512 = vsel %vm125, 0.0, %v508
    %v514 = vsel %vm153, %v509, 0
    %v517 = vsel %vm153, %v510, 0
    %v520 = vsel %vm153, %v511, 0
    %v523 = vsel %vm153, %v512, 0
    %525 = vmatprep.subr.mxu0 0.0
    %526 = vmatpush1.msra.mxu0 %v290
    %527 = vmatprep.subr.mxu0 0.0
    %528 = vmatpush1.msra.mxu0 %v291
    %529 = vmatprep.subr.mxu0 0.0
    %530 = vmatpush1.msra.mxu0 %v292
    %531 = vmatprep.subr.mxu0 0.0
    %532 = vmatpush1.msra.mxu0 %v293
    %533 = vmatprep.subr.mxu0 0.0
    %534 = vmatpush1.msra.mxu0 0.0
    %535 = vmatprep.subr.mxu0 0.0
    %536 = vmatpush1.msra.mxu0 0.0
    %537 = vmatprep.subr.mxu0 0.0
    %538 = vmatpush1.msra.mxu0 0.0
    %539 = vmatprep.subr.mxu0 0.0
    %540 = vmatpush1.msra.mxu0 0.0
    %541 = vmatprep.subr.mxu0 0.0
    %542 = vmatpush1.msra.mxu0 0.0
    %543 = vmatprep.subr.mxu0 0.0
    %544 = vmatpush1.msra.mxu0 0.0
    %545 = vmatprep.subr.mxu0 0.0
    %546 = vmatpush1.msra.mxu0 0.0
    %547 = vmatprep.subr.mxu0 0.0
    %548 = vmatpush1.msra.mxu0 0.0
    %549 = vmatprep.subr.mxu0 0.0
    %550 = vmatpush1.msra.mxu0 0.0
    %551 = vmatprep.subr.mxu0 0.0
    %552 = vmatpush1.msra.mxu0 0.0
    %553 = vmatprep.subr.mxu0 0.0
    %554 = vmatpush1.msra.mxu0 0.0
    %555 = vmatprep.subr.mxu0 0.0
    %556 = vmatpush1.msra.mxu0 0.0
    %557 = vmatprep.subr.mxu0 0.0
    %558 = vmatpush1.msra.mxu0 0.0
    %559 = vmatprep.subr.mxu0 0.0
    %560 = vmatpush1.msra.mxu0 0.0
    %561 = vmatprep.subr.mxu0 0.0
    %562 = vmatpush1.msra.mxu0 0.0
    %563 = vmatprep.subr.mxu0 0.0
    %564 = vmatpush1.msra.mxu0 0.0
    %565 = vmatprep.subr.mxu0 0.0
    %566 = vmatpush1.msra.mxu0 0.0
    %567 = vmatprep.subr.mxu0 0.0
    %568 = vmatpush1.msra.mxu0 0.0
    %569 = vmatprep.subr.mxu0 0.0
    %570 = vmatpush1.msra.mxu0 0.0
    %571 = vmatprep.subr.mxu0 0.0
    %572 = vmatpush1.msra.mxu0 0.0
    %573 = vmatprep.subr.mxu0 0.0
    %574 = vmatpush1.msra.mxu0 0.0
    %575 = vmatprep.subr.mxu0 0.0
    %576 = vmatpush1.msra.mxu0 0.0
    %577 = vmatprep.subr.mxu0 0.0
    %578 = vmatpush1.msra.mxu0 0.0
    %579 = vmatprep.subr.mxu0 0.0
    %580 = vmatpush1.msra.mxu0 0.0
    %581 = vmatprep.subr.mxu0 0.0
    %582 = vmatpush1.msra.mxu0 0.0
    %583 = vmatprep.subr.mxu0 0.0
    %584 = vmatpush1.msra.mxu0 0.0
    %585 = vmatprep.subr.mxu0 0.0
    %586 = vmatpush1.msra.mxu0 0.0
    %587 = vmatprep.subr.mxu0 0.0
    %588 = vmatpush1.msra.mxu0 0.0
    %589 = vmatprep.mubr.f32.mxu0 0.0
    %590 = vmatmul.mubr.f32.gmra.mrb[0].mxu0 %v514
    %v591 = vpop.f32.mrb[0].mxu0
    %v592 = vadd.f32 0.0, %v591
    %v593 = vpop.f32.mrb[0].mxu0
    %594 = vmatprep.mubr.f32.mxu0 0.0
    %595 = vmatmul.mubr.f32.gmra.mrb[0].mxu0 %v517
    %v596 = vpop.f32.mrb[0].mxu0
    %v597 = vadd.f32 0.0, %v596
    %v598 = vpop.f32.mrb[0].mxu0
    %599 = vmatprep.mubr.f32.mxu0 0.0
    %600 = vmatmul.mubr.f32.gmra.mrb[0].mxu0 %v520
    %v601 = vpop.f32.mrb[0].mxu0
    %v602 = vadd.f32 0.0, %v601
    %v603 = vpop.f32.mrb[0].mxu0
    %604 = vmatprep.mubr.f32.mxu0 0.0
    %605 = vmatmul.mubr.f32.gmra.mrb[0].mxu0 %v523
    %v606 = vpop.f32.mrb[0].mxu0
    %v607 = vadd.f32 0.0, %v606
    %v608 = vpop.f32.mrb[0].mxu0
    %609 = vdwg.mxu0
    %v610 = vadd.f32 %v483, %v592
    %v611 = vadd.f32 %v488, %v597
    %v612 = vadd.f32 %v493, %v602
    %v613 = vadd.f32 %v498, %v607
    %v614 = vlaneseq
    %v615 = vshrl.u32 %v614, 7
    %v616 = vsub.s32 0, %v615
    %v617 = vrot.slane %v294, %v616
    %v618 = vadd.f32 %v610, %v617
    %v619 = vadd.f32 %v611, %v617
    %v620 = vadd.f32 %v612, %v617
    %v621 = vadd.f32 %v613, %v617
    %v622 = vld [vmem:[#allocation2 + $0x9] sm:$0xf]
    %v623 = vld [vmem:[#allocation2 + $0xd] sm:$0x1]
    %vm624 = vcmask 523264
    %v625 = vsel %vm624, %v618, 0.0
    %v626 = vsel %vm624, %v619, 0.0
    %v627 = vadd.f32 %v625, %v626
    %v628 = vrot.slane %v627, 4
    %v629 = vadd.f32 %v627, %v628
    %v630 = vrot.slane %v629, 2
    %v631 = vadd.f32 %v629, %v630
    %v632 = vrot.slane %v631, 1
    %v633 = vadd.f32 %v631, %v632
    %v634 = vsel %vm624, %v620, 0.0
    %v635 = vsel %vm624, %v621, 0.0
    %v636 = vadd.f32 %v634, %v635
    %v637 = vrot.slane %v636, 4
    %v638 = vadd.f32 %v636, %v637
    %v639 = vrot.slane %v638, 2
    %v640 = vadd.f32 %v638, %v639
    %v641 = vrot.slane %v640, 1
    %v642 = vadd.f32 %v640, %v641
    %v643 = vmul.f32 %v633, %v172
    %v644 = vmul.f32 %v642, %v172
    %v645 = vlaneseq
    %v646 = vshrl.u32 %v645, 7
    %v647 = vsub.s32 0, %v646
    %v648 = vrot.slane %v622, %v647
    %v649 = vmul.f32 %v643, %v648
    %v650 = vmul.f32 %v644, %v648
    %v653 = vrot.slane %v650, 7
    %v654 = vsel %vm184, %v653, %v649
    %vm656 = vcmask 517120
    %v657 = vsel %vm656, %v654, 0.0
    %658 = vadd.xlane.f32.xlu0 %v657
    %v659 = vpop.xlane.xlu0 %658
    %v660 = vlaneseq
    %v661 = vshrl.u32 %v660, 7
    %v662 = vsub.s32 0, %v661
    %v663 = vrot.slane %v623, %v662
    %v664 = vadd.f32 %v659, %v663
    %v665 = vmax.f32 %v664, 0.0
    %667 = vset.pattern.permute.xlu0 0
    %668 = vperm.xlu0 %667, %v665
    %v669 = vpop.permute.xlu0 %668
    %v671 = vmul.f32 %v669, %v648
    %v672 = vlaneseq
    %v673 = vshrl.u32 %v672, 7
    %v674 = vsub.s32 1, %v673
    %v675 = vrot.slane %v622, %v674
    %v676 = vmul.f32 %v643, %v675
    %v677 = vmul.f32 %v644, %v675
    %v680 = vrot.slane %v677, 7
    %v681 = vsel %vm184, %v680, %v676
    %v683 = vsel %vm656, %v681, 0.0
    %684 = vadd.xlane.f32.xlu0 %v683
    %v685 = vpop.xlane.xlu0 %684
    %v686 = vadd.f32 %v685, %v663
    %v687 = vmax.f32 %v686, 0.0
    %689 = vset.pattern.permute.xlu0 1
    %690 = vperm.xlu0 %689, %v687
    %v691 = vpop.permute.xlu0 %690
    %v693 = vmul.f32 %v691, %v675
    %v694 = vadd.f32 %v671, %v693
    %v695 = vlaneseq
    %v696 = vshrl.u32 %v695, 7
    %v697 = vsub.s32 2, %v696
    %v698 = vrot.slane %v622, %v697
    %v699 = vmul.f32 %v643, %v698
    %v700 = vmul.f32 %v644, %v698
    %v703 = vrot.slane %v700, 7
    %v704 = vsel %vm184, %v703, %v699
    %v706 = vsel %vm656, %v704, 0.0
    %707 = vadd.xlane.f32.xlu0 %v706
    %v708 = vpop.xlane.xlu0 %707
    %v709 = vadd.f32 %v708, %v663
    %v710 = vmax.f32 %v709, 0.0
    %712 = vset.pattern.permute.xlu0 2
    %713 = vperm.xlu0 %712, %v710
    %v714 = vpop.permute.xlu0 %713
    %v716 = vmul.f32 %v714, %v698
    %v717 = vadd.f32 %v694, %v716
    %v718 = vlaneseq
    %v719 = vshrl.u32 %v718, 7
    %v720 = vsub.s32 3, %v719
    %v721 = vrot.slane %v622, %v720
    %v722 = vmul.f32 %v643, %v721
    %v723 = vmul.f32 %v644, %v721
    %v726 = vrot.slane %v723, 7
    %v727 = vsel %vm184, %v726, %v722
    %v729 = vsel %vm656, %v727, 0.0
    %730 = vadd.xlane.f32.xlu0 %v729
    %v731 = vpop.xlane.xlu0 %730
    %v732 = vadd.f32 %v731, %v663
    %v733 = vmax.f32 %v732, 0.0
    %735 = vset.pattern.permute.xlu0 3
    %736 = vperm.xlu0 %735, %v733
    %v737 = vpop.permute.xlu0 %736
    %v739 = vmul.f32 %v737, %v721
    %v740 = vadd.f32 %v717, %v739
    %v741 = vadd.f32 %v740, %v617
    %v742 = vxor.u32 %v741, 2147483648
    %v743 = vmul.f32 %v742, 1.442695
    %v744 = vpow.pop %v743
    %v745 = vadd.f32 %v744, 1.0
    %v746 = vrcp.pop %v745
    %v747 = vmul.f32 1.0, %v746
    %v750 = vunpack.c.l.s4 1966171168
    %v751 = vunpack.c.0.s8 %v750
    %v752 = vlaneseq
    %v753 = vshrl.u32 %v752, 7
    %v754 = vsub.s32 %v751, %v753
    %v755 = vrot.slane %v747, %v754
    %v756 = vcombine.high %v755, %v755
    %v758 = vunpack.c.l.s4 1966171168
    %v759 = vunpack.c.0.s8 %v758
    %v760 = vlaneseq
    %v761 = vshrl.u32 %v760, 7
    %v762 = vsub.s32 %v759, %v761
    %v763 = vrot.slane %v755, %v762
    %v765 = vunpack.c.l.s4 1966171168
    %v766 = vunpack.c.0.s8 %v765
    %v767 = vlaneseq
    %v768 = vshrl.u32 %v767, 7
    %v769 = vsub.s32 %v766, %v768
    %v770 = vrot.slane %v756, %v769
    %v771 = vlaneseq
    %v772 = vshrl.u32 %v771, 7
    %v773 = vsub.s32 0, %v772
    %v774 = vrot.slane %v763, %v773
    %v775 = vlaneseq
    %v776 = vshrl.u32 %v775, 7
    %v777 = vsub.s32 0, %v776
    %v778 = vrot.slane %v770, %v777
    %779 = vrot.lane.b32.xlu0 %v774, 64
    %v780 = vpop.permute.xlu0 %779
    %781 = vrot.lane.b32.xlu0 %v778, 64
    %v782 = vpop.permute.xlu0 %781
    %v785 = vmul.f32 %v618, %v780
    %v786 = vmul.f32 %v619, %v780
    %v787 = vmul.f32 %v620, %v782
    %v788 = vmul.f32 %v621, %v782
    %v789 = vmax.f32 %v785, 0.0
    %v790 = vmax.f32 %v786, 0.0
    %v791 = vmax.f32 %v787, 0.0
    %v792 = vmax.f32 %v788, 0.0
    %v793 = vld [vmem:[#allocation2 + $0x78] sm:$0xff]
    %v794 = vld [vmem:[#allocation2 + $0x80] sm:$0xff]
    %v795 = vld [vmem:[#allocation2 + $0x88] sm:$0xff]
    %v796 = vld [vmem:[#allocation2 + $0x90] sm:$0xff]
    %v797 = vld [vmem:[#allocation2 + $0x98] sm:$0xff]
    %v798 = vld [vmem:[#allocation2 + $0xa0] sm:$0xff]
    %v799 = vld [vmem:[#allocation2 + $0xa8] sm:$0xff]
    %v800 = vld [vmem:[#allocation2 + $0xb0] sm:$0xff]
    %v801 = vld [vmem:[#allocation2 + $0xb8] sm:$0xff]
    %v802 = vld [vmem:[#allocation2 + $0xc0] sm:$0xff]
    %v803 = vld [vmem:[#allocation2 + $0xc8] sm:$0xff]
    %v804 = vld [vmem:[#allocation2 + $0xd0] sm:$0xff]
    %v805 = vld [vmem:[#allocation2 + $0xd8] sm:$0xff]
    %v806 = vld [vmem:[#allocation2 + $0xe0] sm:$0xff]
    %v807 = vld [vmem:[#allocation2 + $0xe8] sm:$0xff]
    %v808 = vld [vmem:[#allocation2 + $0xf0] sm:$0xff]
    %v809 = vld [vmem:[#allocation2 + $0xf8] sm:$0xff]
    %v810 = vld [vmem:[#allocation2 + $0x100] sm:$0xff]
    %v811 = vld [vmem:[#allocation2 + $0x108] sm:$0xff]
    %v812 = vld [vmem:[#allocation2 + $0x110] sm:$0xff]
    %v813 = vld [vmem:[#allocation2 + $0x118] sm:$0xff]
    %v814 = vld [vmem:[#allocation2 + $0x120] sm:$0xff]
    %v815 = vld [vmem:[#allocation2 + $0x128] sm:$0xff]
    %v816 = vld [vmem:[#allocation2 + $0x130] sm:$0xff]
    %v817 = vld [vmem:[#allocation2 + $0x10] sm:$0x1]
    %v818 = vrot.slane %v789, 7
    %v819 = vrot.slane %v790, 7
    %v820 = vrot.slane %v791, 7
    %v821 = vrot.slane %v792, 7
    %v822 = vsel %vm72, %v820, %v821
    %v823 = vsel %vm72, %v819, %v820
    %v824 = vsel %vm72, %v818, %v819
    %v825 = vsel %vm72, %v821, %v818
    %v826 = vsel %vm81, 0.0, %v825
    %v827 = vsel %vm82, 0.0, %v824
    %v828 = vsel %vm83, 0.0, %v823
    %v829 = vsel %vm84, 0.0, %v822
    %v831 = vsel %vm624, %v789, 0
    %v834 = vsel %vm624, %v790, 0
    %v837 = vsel %vm624, %v791, 0
    %v840 = vsel %vm624, %v792, 0
    %842 = vmatprep.subr.mxu0 0.0
    %843 = vmatpush1.msra.mxu0 %v801
    %844 = vmatprep.subr.mxu0 0.0
    %845 = vmatpush1.msra.mxu0 %v802
    %846 = vmatprep.subr.mxu0 0.0
    %847 = vmatpush1.msra.mxu0 %v803
    %848 = vmatprep.subr.mxu0 0.0
    %849 = vmatpush1.msra.mxu0 %v804
    %850 = vmatprep.subr.mxu0 0.0
    %851 = vmatpush1.msra.mxu0 %v805
    %852 = vmatprep.subr.mxu0 0.0
    %853 = vmatpush1.msra.mxu0 %v806
    %854 = vmatprep.subr.mxu0 0.0
    %855 = vmatpush1.msra.mxu0 %v807
    %856 = vmatprep.subr.mxu0 0.0
    %857 = vmatpush1.msra.mxu0 %v808
    %858 = vmatprep.subr.mxu0 0.0
    %859 = vmatpush1.msra.mxu0 0.0
    %860 = vmatprep.subr.mxu0 0.0
    %861 = vmatpush1.msra.mxu0 0.0
    %862 = vmatprep.subr.mxu0 0.0
    %863 = vmatpush1.msra.mxu0 0.0
    %864 = vmatprep.subr.mxu0 0.0
    %865 = vmatpush1.msra.mxu0 0.0
    %866 = vmatprep.subr.mxu0 0.0
    %867 = vmatpush1.msra.mxu0 0.0
    %868 = vmatprep.subr.mxu0 0.0
    %869 = vmatpush1.msra.mxu0 0.0
    %870 = vmatprep.subr.mxu0 0.0
    %871 = vmatpush1.msra.mxu0 0.0
    %872 = vmatprep.subr.mxu0 0.0
    %873 = vmatpush1.msra.mxu0 0.0
    %874 = vmatprep.subr.mxu0 0.0
    %875 = vmatpush1.msra.mxu0 0.0
    %876 = vmatprep.subr.mxu0 0.0
    %877 = vmatpush1.msra.mxu0 0.0
    %878 = vmatprep.subr.mxu0 0.0
    %879 = vmatpush1.msra.mxu0 0.0
    %880 = vmatprep.subr.mxu0 0.0
    %881 = vmatpush1.msra.mxu0 0.0
    %882 = vmatprep.subr.mxu0 0.0
    %883 = vmatpush1.msra.mxu0 0.0
    %884 = vmatprep.subr.mxu0 0.0
    %885 = vmatpush1.msra.mxu0 0.0
    %886 = vmatprep.subr.mxu0 0.0
    %887 = vmatpush1.msra.mxu0 0.0
    %888 = vmatprep.subr.mxu0 0.0
    %889 = vmatpush1.msra.mxu0 0.0
    %890 = vmatprep.subr.mxu0 0.0
    %891 = vmatpush1.msra.mxu0 0.0
    %892 = vmatprep.subr.mxu0 0.0
    %893 = vmatpush1.msra.mxu0 0.0
    %894 = vmatprep.subr.mxu0 0.0
    %895 = vmatpush1.msra.mxu0 0.0
    %896 = vmatprep.subr.mxu0 0.0
    %897 = vmatpush1.msra.mxu0 0.0
    %898 = vmatprep.subr.mxu0 0.0
    %899 = vmatpush1.msra.mxu0 0.0
    %900 = vmatprep.subr.mxu0 0.0
    %901 = vmatpush1.msra.mxu0 0.0
    %902 = vmatprep.subr.mxu0 0.0
    %903 = vmatpush1.msra.mxu0 0.0
    %904 = vmatprep.subr.mxu0 0.0
    %905 = vmatpush1.msra.mxu0 0.0
    %906 = vmatprep.mubr.f32.mxu0 0.0
    %907 = vmatmul.mubr.f32.gmra.mrb[0].mxu0 %v831
    %v908 = vpop.f32.mrb[0].mxu0
    %v909 = vadd.f32 0.0, %v908
    %v910 = vpop.f32.mrb[0].mxu0
    %911 = vmatprep.mubr.f32.mxu0 0.0
    %912 = vmatmul.mubr.f32.gmra.mrb[0].mxu0 %v834
    %v913 = vpop.f32.mrb[0].mxu0
    %v914 = vadd.f32 0.0, %v913
    %v915 = vpop.f32.mrb[0].mxu0
    %916 = vmatprep.mubr.f32.mxu0 0.0
    %917 = vmatmul.mubr.f32.gmra.mrb[0].mxu0 %v837
    %v918 = vpop.f32.mrb[0].mxu0
    %v919 = vadd.f32 0.0, %v918
    %v920 = vpop.f32.mrb[0].mxu0
    %921 = vmatprep.mubr.f32.mxu0 0.0
    %922 = vmatmul.mubr.f32.gmra.mrb[0].mxu0 %v840
    %v923 = vpop.f32.mrb[0].mxu0
    %v924 = vadd.f32 0.0, %v923
    %v925 = vpop.f32.mrb[0].mxu0
    %926 = vdwg.mxu0
    %v928 = vsel %vm624, %v826, 0
    %v931 = vsel %vm624, %v827, 0
    %v934 = vsel %vm624, %v828, 0
    %v937 = vsel %vm624, %v829, 0
    %939 = vmatprep.subr.mxu0 0.0
    %940 = vmatpush1.msra.mxu0 %v793
    %941 = vmatprep.subr.mxu0 0.0
    %942 = vmatpush1.msra.mxu0 %v794
    %943 = vmatprep.subr.mxu0 0.0
    %944 = vmatpush1.msra.mxu0 %v795
    %945 = vmatprep.subr.mxu0 0.0
    %946 = vmatpush1.msra.mxu0 %v796
    %947 = vmatprep.subr.mxu0 0.0
    %948 = vmatpush1.msra.mxu0 %v797
    %949 = vmatprep.subr.mxu0 0.0
    %950 = vmatpush1.msra.mxu0 %v798
    %951 = vmatprep.subr.mxu0 0.0
    %952 = vmatpush1.msra.mxu0 %v799
    %953 = vmatprep.subr.mxu0 0.0
    %954 = vmatpush1.msra.mxu0 %v800
    %955 = vmatprep.subr.mxu0 0.0
    %956 = vmatpush1.msra.mxu0 0.0
    %957 = vmatprep.subr.mxu0 0.0
    %958 = vmatpush1.msra.mxu0 0.0
    %959 = vmatprep.subr.mxu0 0.0
    %960 = vmatpush1.msra.mxu0 0.0
    %961 = vmatprep.subr.mxu0 0.0
    %962 = vmatpush1.msra.mxu0 0.0
    %963 = vmatprep.subr.mxu0 0.0
    %964 = vmatpush1.msra.mxu0 0.0
    %965 = vmatprep.subr.mxu0 0.0
    %966 = vmatpush1.msra.mxu0 0.0
    %967 = vmatprep.subr.mxu0 0.0
    %968 = vmatpush1.msra.mxu0 0.0
    %969 = vmatprep.subr.mxu0 0.0
    %970 = vmatpush1.msra.mxu0 0.0
    %971 = vmatprep.subr.mxu0 0.0
    %972 = vmatpush1.msra.mxu0 0.0
    %973 = vmatprep.subr.mxu0 0.0
    %974 = vmatpush1.msra.mxu0 0.0
    %975 = vmatprep.subr.mxu0 0.0
    %976 = vmatpush1.msra.mxu0 0.0
    %977 = vmatprep.subr.mxu0 0.0
    %978 = vmatpush1.msra.mxu0 0.0
    %979 = vmatprep.subr.mxu0 0.0
    %980 = vmatpush1.msra.mxu0 0.0
    %981 = vmatprep.subr.mxu0 0.0
    %982 = vmatpush1.msra.mxu0 0.0
    %983 = vmatprep.subr.mxu0 0.0
    %984 = vmatpush1.msra.mxu0 0.0
    %985 = vmatprep.subr.mxu0 0.0
    %986 = vmatpush1.msra.mxu0 0.0
    %987 = vmatprep.subr.mxu0 0.0
    %988 = vmatpush1.msra.mxu0 0.0
    %989 = vmatprep.subr.mxu0 0.0
    %990 = vmatpush1.msra.mxu0 0.0
    %991 = vmatprep.subr.mxu0 0.0
    %992 = vmatpush1.msra.mxu0 0.0
    %993 = vmatprep.subr.mxu0 0.0
    %994 = vmatpush1.msra.mxu0 0.0
    %995 = vmatprep.subr.mxu0 0.0
    %996 = vmatpush1.msra.mxu0 0.0
    %997 = vmatprep.subr.mxu0 0.0
    %998 = vmatpush1.msra.mxu0 0.0
    %999 = vmatprep.subr.mxu0 0.0
    %1000 = vmatpush1.msra.mxu0 0.0
    %1001 = vmatprep.subr.mxu0 0.0
    %1002 = vmatpush1.msra.mxu0 0.0
    %1003 = vmatprep.mubr.f32.mxu0 0.0
    %1004 = vmatmul.mubr.f32.gmra.mrb[0].mxu0 %v928
    %v1005 = vpop.f32.mrb[0].mxu0
    %v1006 = vadd.f32 %v909, %v1005
    %v1007 = vpop.f32.mrb[0].mxu0
    %1008 = vmatprep.mubr.f32.mxu0 0.0
    %1009 = vmatmul.mubr.f32.gmra.mrb[0].mxu0 %v931
    %v1010 = vpop.f32.mrb[0].mxu0
    %v1011 = vadd.f32 %v914, %v1010
    %v1012 = vpop.f32.mrb[0].mxu0
    %1013 = vmatprep.mubr.f32.mxu0 0.0
    %1014 = vmatmul.mubr.f32.gmra.mrb[0].mxu0 %v934
    %v1015 = vpop.f32.mrb[0].mxu0
    %v1016 = vadd.f32 %v919, %v1015
    %v1017 = vpop.f32.mrb[0].mxu0
    %1018 = vmatprep.mubr.f32.mxu0 0.0
    %1019 = vmatmul.mubr.f32.gmra.mrb[0].mxu0 %v937
    %v1020 = vpop.f32.mrb[0].mxu0
    %v1021 = vadd.f32 %v924, %v1020
    %v1022 = vpop.f32.mrb[0].mxu0
    %1023 = vdwg.mxu0
    %v1024 = vrot.slane %v789, 1
    %v1025 = vrot.slane %v790, 1
    %v1026 = vrot.slane %v791, 1
    %v1027 = vrot.slane %v792, 1
    %v1028 = vsel %vm113, %v1026, %v1027
    %v1029 = vsel %vm113, %v1025, %v1026
    %v1030 = vsel %vm113, %v1024, %v1025
    %v1031 = vsel %vm113, %v1027, %v1024
    %v1032 = vsel %vm122, 0.0, %v1030
    %v1033 = vsel %vm123, 0.0, %v1029
    %v1034 = vsel %vm124, 0.0, %v1028
    %v1035 = vsel %vm125, 0.0, %v1031
    %v1037 = vsel %vm624, %v1032, 0
    %v1040 = vsel %vm624, %v1033, 0
    %v1043 = vsel %vm624, %v1034, 0
    %v1046 = vsel %vm624, %v1035, 0
    %1048 = vmatprep.subr.mxu0 0.0
    %1049 = vmatpush1.msra.mxu0 %v809
    %1050 = vmatprep.subr.mxu0 0.0
    %1051 = vmatpush1.msra.mxu0 %v810
    %1052 = vmatprep.subr.mxu0 0.0
    %1053 = vmatpush1.msra.mxu0 %v811
    %1054 = vmatprep.subr.mxu0 0.0
    %1055 = vmatpush1.msra.mxu0 %v812
    %1056 = vmatprep.subr.mxu0 0.0
    %1057 = vmatpush1.msra.mxu0 %v813
    %1058 = vmatprep.subr.mxu0 0.0
    %1059 = vmatpush1.msra.mxu0 %v814
    %1060 = vmatprep.subr.mxu0 0.0
    %1061 = vmatpush1.msra.mxu0 %v815
    %1062 = vmatprep.subr.mxu0 0.0
    %1063 = vmatpush1.msra.mxu0 %v816
    %1064 = vmatprep.subr.mxu0 0.0
    %1065 = vmatpush1.msra.mxu0 0.0
    %1066 = vmatprep.subr.mxu0 0.0
    %1067 = vmatpush1.msra.mxu0 0.0
    %1068 = vmatprep.subr.mxu0 0.0
    %1069 = vmatpush1.msra.mxu0 0.0
    %1070 = vmatprep.subr.mxu0 0.0
    %1071 = vmatpush1.msra.mxu0 0.0
    %1072 = vmatprep.subr.mxu0 0.0
    %1073 = vmatpush1.msra.mxu0 0.0
    %1074 = vmatprep.subr.mxu0 0.0
    %1075 = vmatpush1.msra.mxu0 0.0
    %1076 = vmatprep.subr.mxu0 0.0
    %1077 = vmatpush1.msra.mxu0 0.0
    %1078 = vmatprep.subr.mxu0 0.0
    %1079 = vmatpush1.msra.mxu0 0.0
    %1080 = vmatprep.subr.mxu0 0.0
    %1081 = vmatpush1.msra.mxu0 0.0
    %1082 = vmatprep.subr.mxu0 0.0
    %1083 = vmatpush1.msra.mxu0 0.0
    %1084 = vmatprep.subr.mxu0 0.0
    %1085 = vmatpush1.msra.mxu0 0.0
    %1086 = vmatprep.subr.mxu0 0.0
    %1087 = vmatpush1.msra.mxu0 0.0
    %1088 = vmatprep.subr.mxu0 0.0
    %1089 = vmatpush1.msra.mxu0 0.0
    %1090 = vmatprep.subr.mxu0 0.0
    %1091 = vmatpush1.msra.mxu0 0.0
    %1092 = vmatprep.subr.mxu0 0.0
    %1093 = vmatpush1.msra.mxu0 0.0
    %1094 = vmatprep.subr.mxu0 0.0
    %1095 = vmatpush1.msra.mxu0 0.0
    %1096 = vmatprep.subr.mxu0 0.0
    %1097 = vmatpush1.msra.mxu0 0.0
    %1098 = vmatprep.subr.mxu0 0.0
    %1099 = vmatpush1.msra.mxu0 0.0
    %1100 = vmatprep.subr.mxu0 0.0
    %1101 = vmatpush1.msra.mxu0 0.0
    %1102 = vmatprep.subr.mxu0 0.0
    %1103 = vmatpush1.msra.mxu0 0.0
    %1104 = vmatprep.subr.mxu0 0.0
    %1105 = vmatpush1.msra.mxu0 0.0
    %1106 = vmatprep.subr.mxu0 0.0
    %1107 = vmatpush1.msra.mxu0 0.0
    %1108 = vmatprep.subr.mxu0 0.0
    %1109 = vmatpush1.msra.mxu0 0.0
    %1110 = vmatprep.subr.mxu0 0.0
    %1111 = vmatpush1.msra.mxu0 0.0
    %1112 = vmatprep.mubr.f32.mxu0 0.0
    %1113 = vmatmul.mubr.f32.gmra.mrb[0].mxu0 %v1037
    %v1114 = vpop.f32.mrb[0].mxu0
    %v1115 = vadd.f32 0.0, %v1114
    %v1116 = vpop.f32.mrb[0].mxu0
    %1117 = vmatprep.mubr.f32.mxu0 0.0
    %1118 = vmatmul.mubr.f32.gmra.mrb[0].mxu0 %v1040
    %v1119 = vpop.f32.mrb[0].mxu0
    %v1120 = vadd.f32 0.0, %v1119
    %v1121 = vpop.f32.mrb[0].mxu0
    %1122 = vmatprep.mubr.f32.mxu0 0.0
    %1123 = vmatmul.mubr.f32.gmra.mrb[0].mxu0 %v1043
    %v1124 = vpop.f32.mrb[0].mxu0
    %v1125 = vadd.f32 0.0, %v1124
    %v1126 = vpop.f32.mrb[0].mxu0
    %1127 = vmatprep.mubr.f32.mxu0 0.0
    %1128 = vmatmul.mubr.f32.gmra.mrb[0].mxu0 %v1046
    %v1129 = vpop.f32.mrb[0].mxu0
    %v1130 = vadd.f32 0.0, %v1129
    %v1131 = vpop.f32.mrb[0].mxu0
    %1132 = vdwg.mxu0
    %v1133 = vadd.f32 %v1006, %v1115
    %v1134 = vadd.f32 %v1011, %v1120
    %v1135 = vadd.f32 %v1016, %v1125
    %v1136 = vadd.f32 %v1021, %v1130
    %v1137 = vlaneseq
    %v1138 = vshrl.u32 %v1137, 7
    %v1139 = vsub.s32 0, %v1138
    %v1140 = vrot.slane %v817, %v1139
    %v1141 = vadd.f32 %v1133, %v1140
    %v1142 = vadd.f32 %v1134, %v1140
    %v1143 = vadd.f32 %v1135, %v1140
    %v1144 = vadd.f32 %v1136, %v1140
    %v1145 = vmax.f32 %v1141, 0.0
    %v1146 = vmax.f32 %v1142, 0.0
    %v1147 = vmax.f32 %v1143, 0.0
    %v1148 = vmax.f32 %v1144, 0.0
    %v1149 = vadd.f32 %v1145, %v1146
    %v1150 = vrot.slane %v1149, 4
    %v1151 = vadd.f32 %v1149, %v1150
    %v1152 = vrot.slane %v1151, 2
    %v1153 = vadd.f32 %v1151, %v1152
    %v1154 = vrot.slane %v1153, 1
    %v1155 = vadd.f32 %v1153, %v1154
    %v1156 = vadd.f32 %v1147, %v1148
    %v1157 = vrot.slane %v1156, 4
    %v1158 = vadd.f32 %v1156, %v1157
    %v1159 = vrot.slane %v1158, 2
    %v1160 = vadd.f32 %v1158, %v1159
    %v1161 = vrot.slane %v1160, 1
    %v1162 = vadd.f32 %v1160, %v1161
    %v1163 = vmul.f32 %v1155, %v172
    %v1164 = vmul.f32 %v1162, %v172
    %v1165 = vld [vmem:[#allocation2 + $0x11] sm:$0x3]
    %v1166 = vmul.f32 %v1163, %v1165
    %v1167 = vmul.f32 %v1164, %v1165
    %vm1168 = vcmask 1041408
    %v1169 = vsel %vm1168, %v1166, 0.0
    %1170 = vadd.xlane.f32.xlu0 %v1169
    %v1171 = vpop.xlane.xlu0 %1170
    %v1172 = vsel %vm1168, %v1167, 0.0
    %1173 = vadd.xlane.f32.xlu0 %v1172
    %v1174 = vpop.xlane.xlu0 %1173
    %v1175 = vld [vmem:[#allocation2 + $0x13] sm:$0x1]
    %v1176 = vlaneseq
    %v1177 = vshrl.u32 %v1176, 7
    %v1178 = vsub.s32 0, %v1177
    %v1179 = vrot.slane %v1175, %v1178
    %1182 = vbcast.lane.b32.xlu0 %v1179, 256
    %v1183 = vpop.permute.xlu0 %1182
    %v1185 = vadd.f32 %v1171, %v1183
    %v1186 = vadd.f32 %v1174, %v1183
    %1189 = vset.pattern.permute.xlu0 0
    %1190 = vperm.xlu0 %1189, %v1185
    %v1191 = vpop.permute.xlu0 %1190
    %1192 = vset.pattern.permute.xlu0 0
    %1193 = vperm.xlu0 %1192, %v1186
    %v1194 = vpop.permute.xlu0 %1193
    %v1195 = vlaneseq
    %v1196 = vand.u32 %v1195, 127
    %v1197 = vlaneseq
    %v1198 = vshrl.u32 %v1197, 7
    %v1199 = vsub.s32 %v1196, %v1198
    %v1200 = vrot.slane %v1191, %v1199
    %v1201 = vlaneseq
    %v1202 = vshrl.u32 %v1201, 7
    %v1203 = vsub.s32 %v1196, %v1202
    %v1204 = vrot.slane %v1194, %v1203
    %v1205 = vsel %vm184, %v1204, %v1200
    %vm1207 = vcmask 9216
    %1208 = vst.msk [vmem:[#allocation5] sm:$0x3] %vm1207, %v1205
    // Predicated region
    $region14: #{tpu_custom_call.1} parent=1 // pred_check
      _
    $region15: #{tpu_custom_call.1} parent=1 // pred_check_branch
      %1210 = sbr.rel (0) target = $region17
    $region16: #{tpu_custom_call.1} parent=1 // pred_region
      %s1212 = ssub.s32 32, 32
      %1213 = vsyncadd [#allocation4], %s1212
      %s1215 = sshll.u32 [#allocation5], 4
      %s1216 = int_to_ptr.vmem [resolvable:$true] %s1215
      %1218 = dma.vmem_to_hbm [thread:$0]  %s1216, 32, %s2, [#allocation4]
    $region17: #{tpu_custom_call.1} parent=1 // pred_fallthru
      _
    // Predicated region
    $region18: #{tpu_custom_call.1} parent=1 // pred_check
      _
    $region19: #{tpu_custom_call.1} parent=1 // pred_check_branch
      %1220 = sbr.rel (0) target = $region21
    $region20: #{tpu_custom_call.1} parent=1 // pred_region
      %1221 = dma.done [#allocation4], 32
    $region21: #{tpu_custom_call.1} parent=1 // pred_fallthru
      _
    %1222 = vsyncpa [#allocation3], 1
    %1223 = vsyncpa [#allocation4], 1

</llo_original>
